<compile_context>
chip_gen: v7x
topology: tpu7x:2x2x1
jax: 0.10.0
libtpu: 0.0.40
codegen_flags: <defaults>
</compile_context>

<pallas_src>
import functools

import jax
import jax.numpy as jnp
from jax import lax
from jax.experimental import pallas as pl
from jax.experimental.pallas import tpu as pltpu


# ----------------------------- Pallas kernel --------------------------------


def rgcn_layer_kernel(x_src_ref, x_tgt_ref, adj_ref, relw_ref, rootw_ref,
                      rootb_ref, type_oh_ref, o_ref, acc_ref, *,
                      num_edge_types, num_node_types, c_pad, c_valid, activation):
    k = pl.program_id(1)

    # ---- init accumulator with root (self) transform + per-node bias, once per m tile ----
    @pl.when(k == 0)
    def _init():
        # one fused lane-dense matmul over all node types: [tile_m, T*Cp]
        root_all = jnp.dot(x_tgt_ref[...], rootw_ref[...],
                           preferred_element_type=jnp.float32)
        acc = rootb_ref[...]                       # bias already gathered per node (f32)
        type_oh = type_oh_ref[...]
        for t in range(num_node_types):            # VPU selects instead of gated matmuls
            acc = acc + type_oh[:, t:t + 1] * root_all[:, t * c_pad:(t + 1) * c_pad]
        acc_ref[...] = acc

    # ---- message transform: ONE lane-dense matmul over all edge types ----
    msg_all = jnp.dot(x_src_ref[...], relw_ref[...],
                      preferred_element_type=jnp.float32)       # [tile_k, R*Cp]
    msg_all = msg_all.astype(adj_ref.dtype)                     # bf16 for MXU aggregation

    # ---- mean aggregation: R matmuls on 128-lane-aligned slices, f32 accumulate ----
    adj = adj_ref[...]                                          # [R, tile_m, tile_k] bf16
    partial = jnp.dot(adj[0], msg_all[:, :c_pad],
                      preferred_element_type=jnp.float32)
    for r in range(1, num_edge_types):
        partial = partial + jnp.dot(adj[r], msg_all[:, r * c_pad:(r + 1) * c_pad],
                                    preferred_element_type=jnp.float32)
    acc_ref[...] += partial

    # ---- epilogue: activation + lane-dense store at the last k step ----
    @pl.when(k == pl.num_programs(1) - 1)
    def _store():
        acc = acc_ref[...]
        if activation == "relu":
            acc = jnp.maximum(acc, 0.0)
        elif activation == "log_softmax":
            lane = lax.broadcasted_iota(jnp.int32, acc.shape, 1)
            acc = jnp.where(lane < c_valid, acc, -jnp.inf)      # mask padded lanes
            m = jnp.max(acc, axis=-1, keepdims=True)
            s = acc - m
            lse = jnp.log(jnp.sum(jnp.exp(s), axis=-1, keepdims=True))
            acc = s - lse
        o_ref[...] = acc


def _round_up(x, m):
    return ((x + m - 1) // m) * m


def rgcn_layer(x_src, x_tgt, adj, rel_w, root_w, root_b, node_type_tgt,
               activation, *, tile_m=128, tile_k=512):
    """Pallas RGCNConv layer. adj: [R, n_tgt, n_src] row-normalized (bf16)."""
    n_src, c_in = x_src.shape
    n_tgt = x_tgt.shape[0]
    num_edge_types, _, c_out = rel_w.shape
    num_node_types = root_w.shape[0]

    c_pad = _round_up(c_out, 128)
    tile_m = min(tile_m, _round_up(n_tgt, 8))
    tile_k = min(tile_k, _round_up(n_src, 128))
    n_tgt_p = _round_up(n_tgt, tile_m)
    n_src_p = _round_up(n_src, tile_k)
    grid = (n_tgt_p // tile_m, n_src_p // tile_k)

    # ---- pad / pack operands (bf16 matmul inputs, f32 accumulation) ----
    x_src_p = jnp.pad(x_src, ((0, n_src_p - n_src), (0, 0))).astype(jnp.bfloat16)
    x_tgt_p = jnp.pad(x_tgt, ((0, n_tgt_p - n_tgt), (0, 0))).astype(jnp.bfloat16)
    adj_p = jnp.pad(adj.astype(jnp.bfloat16),
                    ((0, 0), (0, n_tgt_p - n_tgt), (0, n_src_p - n_src)))
    relw_cat = jnp.concatenate(
        [jnp.pad(rel_w[r], ((0, 0), (0, c_pad - c_out)))
         for r in range(num_edge_types)], axis=-1).astype(jnp.bfloat16)
    rootw_cat = jnp.concatenate(
        [jnp.pad(root_w[t], ((0, 0), (0, c_pad - c_out)))
         for t in range(num_node_types)], axis=-1).astype(jnp.bfloat16)
    rootb_pad = jnp.pad(root_b, ((0, 0), (0, c_pad - c_out))).astype(jnp.float32)
    rootb_node = jnp.pad(rootb_pad[node_type_tgt], ((0, n_tgt_p - n_tgt), (0, 0)))
    type_oh = jax.nn.one_hot(node_type_tgt, num_node_types, dtype=jnp.float32)
    type_oh = jnp.pad(type_oh, ((0, n_tgt_p - n_tgt), (0, 0)))

    kernel = functools.partial(
        rgcn_layer_kernel, num_edge_types=num_edge_types,
        num_node_types=num_node_types, c_pad=c_pad, c_valid=c_out,
        activation=activation)

    out = pl.pallas_call(
        kernel,
        out_shape=jax.ShapeDtypeStruct((n_tgt_p, c_pad), jnp.float32),
        grid_spec=pltpu.PrefetchScalarGridSpec(
            num_scalar_prefetch=0,
            grid=grid,
            in_specs=[
                pl.BlockSpec((tile_k, c_in), lambda m, k: (k, 0)),            # x_src
                pl.BlockSpec((tile_m, c_in), lambda m, k: (m, 0)),            # x_tgt
                pl.BlockSpec((num_edge_types, tile_m, tile_k),
                             lambda m, k: (0, m, k)),                         # adj
                pl.BlockSpec((c_in, num_edge_types * c_pad),
                             lambda m, k: (0, 0)),                            # W_cat
                pl.BlockSpec((c_in, num_node_types * c_pad),
                             lambda m, k: (0, 0)),                            # RootW_cat
                pl.BlockSpec((tile_m, c_pad), lambda m, k: (m, 0)),           # bias/node
                pl.BlockSpec((tile_m, num_node_types), lambda m, k: (m, 0)),  # one-hot
            ],
            out_specs=pl.BlockSpec((tile_m, c_pad), lambda m, k: (m, 0)),
            scratch_shapes=[pltpu.VMEM((tile_m, c_pad), jnp.float32)],
        ),
        compiler_params=pltpu.CompilerParams(
            dimension_semantics=("parallel", "arbitrary")),
    )(x_src_p, x_tgt_p, adj_p, relw_cat, rootw_cat, rootb_node, type_oh)
    return out[:n_tgt, :c_out]


# ------------------------------ JAX glue -------------------------------------


def build_dense_adj(edge_index, edge_type, n_tgt, n_src, num_edge_types):
    """Row-normalized per-edge-type dense adjacency (PyG mean aggregation), bf16."""
    src = edge_index[0]
    dst = edge_index[1]
    adj = jnp.zeros((num_edge_types, n_tgt, n_src), jnp.float32)
    adj = adj.at[edge_type, dst, src].add(1.0)     # duplicates counted, like PyG
    deg = adj.sum(axis=-1, keepdims=True)
    return (adj / jnp.maximum(deg, 1.0)).astype(jnp.bfloat16)


def group_input(feat_tables, node_type, local_node_idx, n_id, in_channels):
    nt = node_type[n_id]
    lidx = local_node_idx[n_id]
    h = jnp.zeros((n_id.shape[0], in_channels), jnp.float32)
    for key, tbl in feat_tables.items():
        mask = (nt == key)[:, None]
        h = jnp.where(mask, tbl[lidx], h)
    return h


def rgnn_forward(params, feat_tables, n_id, adjs, edge_type_all,
                 node_type, local_node_idx, *, in_channels,
                 num_edge_types, num_node_types, layer_fn):
    x = group_input(feat_tables, node_type, local_node_idx, n_id, in_channels)
    nt = node_type[n_id]
    num_layers = len(adjs)
    for i, (edge_index, e_id, size) in enumerate(adjs):
        n_tgt = size[1]
        x_target = x[:n_tgt]
        nt = nt[:n_tgt]
        et = edge_type_all[e_id]
        adj = build_dense_adj(edge_index, et, n_tgt, x.shape[0], num_edge_types)
        act = "relu" if i != num_layers - 1 else "log_softmax"
        x = layer_fn(x, x_target, adj,
                     params[i]["rel_w"], params[i]["root_w"], params[i]["root_b"],
                     nt, act)
    return x


def rgcn_layer_ref(x_src, x_tgt, adj, rel_w, root_w, root_b, node_type_tgt,
                   activation, **unused_tiling):
    """Pure-JAX reference (same bf16-input / f32-accumulate recipe as the kernel)."""
    num_edge_types = rel_w.shape[0]
    num_node_types = root_w.shape[0]
    xs = x_src.astype(jnp.bfloat16)
    xt = x_tgt.astype(jnp.bfloat16)
    acc = root_b[node_type_tgt].astype(jnp.float32)
    oh = jax.nn.one_hot(node_type_tgt, num_node_types, dtype=jnp.float32)
    for t in range(num_node_types):
        root = jnp.dot(xt, root_w[t].astype(jnp.bfloat16),
                       preferred_element_type=jnp.float32)
        acc = acc + oh[:, t:t + 1] * root
    for r in range(num_edge_types):
        msg = jnp.dot(xs, rel_w[r].astype(jnp.bfloat16),
                      preferred_element_type=jnp.float32).astype(jnp.bfloat16)
        acc = acc + jnp.dot(adj[r].astype(jnp.bfloat16), msg,
                            preferred_element_type=jnp.float32)
    if activation == "relu":
        acc = jnp.maximum(acc, 0.0)
    elif activation == "log_softmax":
        acc = jax.nn.log_softmax(acc, axis=-1)
    return acc


# ------------------------------ main -----------------------------------------

if __name__ == "__main__":
    NUM_NODE_TYPES = 3
    NUM_EDGE_TYPES = 4
    IN_C, HID_C, OUT_C = 16, 32, 8
    NODES_PER_TYPE = [80, 64, 48]
    TOTAL_EDGE_IDS = 1000

    keys = iter(jax.random.split(jax.random.PRNGKey(0), 64))

    def nextk():
        return next(keys)

    def glorot(shape):
        fan_in, fan_out = shape[-2], shape[-1]
        lim = (6.0 / (fan_in + fan_out)) ** 0.5
        return jax.random.uniform(nextk(), shape, jnp.float32, -lim, lim)

    # ---- parameters (deterministic synthetic init) ----
    layer_dims = [(IN_C, HID_C), (HID_C, OUT_C)]
    params = []
    for ci, co in layer_dims:
        params.append({
            "rel_w": glorot((NUM_EDGE_TYPES, ci, co)),
            "root_w": glorot((NUM_NODE_TYPES, ci, co)),
            "root_b": glorot((NUM_NODE_TYPES, co)) * 0.1,
        })

    # ---- per-type feature / embedding tables (group_input sources) ----
    feat_tables = {
        t: jax.random.normal(nextk(), (NODES_PER_TYPE[t], IN_C), jnp.float32)
        for t in range(NUM_NODE_TYPES)
    }

    # ---- global graph bookkeeping ----
    node_type = jnp.concatenate(
        [jnp.full((n,), t, jnp.int32) for t, n in enumerate(NODES_PER_TYPE)])
    local_node_idx = jnp.concatenate(
        [jnp.arange(n, dtype=jnp.int32) for n in NODES_PER_TYPE])
    total_nodes = int(node_type.shape[0])
    edge_type_all = jax.random.randint(nextk(), (TOTAL_EDGE_IDS,), 0,
                                       NUM_EDGE_TYPES, jnp.int32)

    # sampled mini-batch (NeighborSampler style): n_id + two bipartite adjs
    n_id = jax.random.permutation(nextk(), total_nodes)[:160].astype(jnp.int32)
    SIZES = [(160, 96), (96, 48)]
    NUM_EDGES = [400, 200]
    adjs = []
    for (n_src, n_tgt), ne in zip(SIZES, NUM_EDGES):
        src = jax.random.randint(nextk(), (ne,), 0, n_src, jnp.int32)
        dst = jax.random.randint(nextk(), (ne,), 0, n_tgt, jnp.int32)
        e_id = jax.random.randint(nextk(), (ne,), 0, TOTAL_EDGE_IDS, jnp.int32)
        adjs.append((jnp.stack([src, dst]), e_id, (n_src, n_tgt)))

    common = dict(in_channels=IN_C, num_edge_types=NUM_EDGE_TYPES,
                  num_node_types=NUM_NODE_TYPES)

    # small tiles here so the demo exercises a >1 (m, k) grid; defaults are larger.
    pallas_layer = functools.partial(rgcn_layer, tile_m=64, tile_k=128)

    out = rgnn_forward(params, feat_tables, n_id, adjs, edge_type_all,
                       node_type, local_node_idx, layer_fn=pallas_layer, **common)
    out = jax.block_until_ready(out)

    ref = rgnn_forward(params, feat_tables, n_id, adjs, edge_type_all,
                       node_type, local_node_idx, layer_fn=rgcn_layer_ref, **common)
    ref = jax.block_until_ready(ref)

    assert out.shape == (SIZES[-1][1], OUT_C), out.shape
    max_err = float(jnp.max(jnp.abs(out - ref)))
    assert jnp.allclose(out, ref, atol=5e-3, rtol=5e-3), max_err

    print("KERNEL_OK")
</pallas_src>

<mosaic_0001>
module attributes {stable_mosaic.version = 11 : i64} {
  func.func @rgcn_layer_kernel(%arg0: i32, %arg1: i32, %arg2: memref<128x16xbf16, #tpu.memory_space<vmem>>, %arg3: memref<64x16xbf16, #tpu.memory_space<vmem>>, %arg4: memref<4x64x128xbf16, #tpu.memory_space<vmem>>, %arg5: memref<16x512xbf16, #tpu.memory_space<vmem>>, %arg6: memref<16x384xbf16, #tpu.memory_space<vmem>>, %arg7: memref<64x128xf32, #tpu.memory_space<vmem>>, %arg8: memref<64x3xf32, #tpu.memory_space<vmem>>, %arg9: memref<64x128xf32, #tpu.memory_space<vmem>>, %arg10: memref<64x128xf32, #tpu.memory_space<vmem>>) attributes {dimension_semantics = [#tpu.dimension_semantics<parallel>, #tpu.dimension_semantics<arbitrary>], iteration_bounds = array<i64: 2, 2>, scalar_prefetch = 0 : i64, scratch_operands = 1 : i64, tpu.core_type = #tpu.core_type<tc>, window_params = [{transform_indices = @transform_0, window_bounds = array<i64: 128, 16>}, {transform_indices = @transform_1, window_bounds = array<i64: 64, 16>}, {transform_indices = @transform_2, window_bounds = array<i64: 4, 64, 128>}, {pipeline_mode = #tpu.pipeline_mode<synchronous>, transform_indices = @transform_3, window_bounds = array<i64: 16, 512>}, {pipeline_mode = #tpu.pipeline_mode<synchronous>, transform_indices = @transform_4, window_bounds = array<i64: 16, 384>}, {transform_indices = @transform_5, window_bounds = array<i64: 64, 128>}, {transform_indices = @transform_6, window_bounds = array<i64: 64, 3>}, {transform_indices = @transform_7, window_bounds = array<i64: 64, 128>}]} {
    %c0_i32 = arith.constant 0 : i32
    %0 = arith.cmpi eq, %arg1, %c0_i32 : i32
    %1 = arith.extui %0 : i1 to i32
    %c0_i32_0 = arith.constant 0 : i32
    %2 = arith.cmpi ne, %1, %c0_i32_0 : i32
    scf.if %2 {
      %c0_16 = arith.constant 0 : index
      %c0_17 = arith.constant 0 : index
      %33 = vector.load %arg3[%c0_16, %c0_17] : memref<64x16xbf16, #tpu.memory_space<vmem>>, vector<64x16xbf16>
      %c0_18 = arith.constant 0 : index
      %c0_19 = arith.constant 0 : index
      %34 = vector.load %arg6[%c0_18, %c0_19] : memref<16x384xbf16, #tpu.memory_space<vmem>>, vector<16x384xbf16>
      %cst_20 = arith.constant dense<0.000000e+00> : vector<64x384xf32>
      %35 = tpu.matmul %33, %34, %cst_20 {dimension_numbers = #tpu.dot_dimension_numbers<[1], [0], [0], [1], [0, 0, 1, 1], [], []>} : vector<64x16xbf16>, vector<16x384xbf16>, vector<64x384xf32> -> vector<64x384xf32>
      %c0_21 = arith.constant 0 : index
      %c0_22 = arith.constant 0 : index
      %36 = vector.load %arg7[%c0_21, %c0_22] : memref<64x128xf32, #tpu.memory_space<vmem>>, vector<64x128xf32>
      %c0_23 = arith.constant 0 : index
      %c0_24 = arith.constant 0 : index
      %37 = vector.load %arg8[%c0_23, %c0_24] : memref<64x3xf32, #tpu.memory_space<vmem>>, vector<64x3xf32>
      %38 = vector.extract_strided_slice %37 {offsets = [0, 0], sizes = [64, 1], strides = [1, 1]} : vector<64x3xf32> to vector<64x1xf32>
      %39 = vector.extract_strided_slice %35 {offsets = [0, 0], sizes = [64, 128], strides = [1, 1]} : vector<64x384xf32> to vector<64x128xf32>
      %40 = vector.broadcast %38 : vector<64x1xf32> to vector<64x128xf32>
      %41 = arith.mulf %40, %39 : vector<64x128xf32>
      %42 = arith.addf %36, %41 : vector<64x128xf32>
      %43 = vector.extract_strided_slice %37 {offsets = [0, 1], sizes = [64, 1], strides = [1, 1]} : vector<64x3xf32> to vector<64x1xf32>
      %44 = vector.extract_strided_slice %35 {offsets = [0, 128], sizes = [64, 128], strides = [1, 1]} : vector<64x384xf32> to vector<64x128xf32>
      %45 = vector.broadcast %43 : vector<64x1xf32> to vector<64x128xf32>
      %46 = arith.mulf %45, %44 : vector<64x128xf32>
      %47 = arith.addf %42, %46 : vector<64x128xf32>
      %48 = vector.extract_strided_slice %37 {offsets = [0, 2], sizes = [64, 1], strides = [1, 1]} : vector<64x3xf32> to vector<64x1xf32>
      %49 = vector.extract_strided_slice %35 {offsets = [0, 256], sizes = [64, 128], strides = [1, 1]} : vector<64x384xf32> to vector<64x128xf32>
      %50 = vector.broadcast %48 : vector<64x1xf32> to vector<64x128xf32>
      %51 = arith.mulf %50, %49 : vector<64x128xf32>
      %52 = arith.addf %47, %51 : vector<64x128xf32>
      %c0_25 = arith.constant 0 : index
      %c0_26 = arith.constant 0 : index
      %53 = vector.load %arg10[%c0_25, %c0_26] : memref<64x128xf32, #tpu.memory_space<vmem>>, vector<64x128xf32>
      tpu.vector_store %arg10[%c0_25, %c0_26], %52 {strides = array<i32>} : memref<64x128xf32, #tpu.memory_space<vmem>>, vector<64x128xf32>,
    } else {
    }
    %c0 = arith.constant 0 : index
    %c0_1 = arith.constant 0 : index
    %3 = vector.load %arg2[%c0, %c0_1] : memref<128x16xbf16, #tpu.memory_space<vmem>>, vector<128x16xbf16>
    %c0_2 = arith.constant 0 : index
    %c0_3 = arith.constant 0 : index
    %4 = vector.load %arg5[%c0_2, %c0_3] : memref<16x512xbf16, #tpu.memory_space<vmem>>, vector<16x512xbf16>
    %cst = arith.constant dense<0.000000e+00> : vector<128x512xf32>
    %5 = tpu.matmul %3, %4, %cst {dimension_numbers = #tpu.dot_dimension_numbers<[1], [0], [0], [1], [0, 0, 1, 1], [], []>} : vector<128x16xbf16>, vector<16x512xbf16>, vector<128x512xf32> -> vector<128x512xf32>
    %6 = arith.truncf %5 : vector<128x512xf32> to vector<128x512xbf16>
    %c0_4 = arith.constant 0 : index
    %c0_5 = arith.constant 0 : index
    %c0_6 = arith.constant 0 : index
    %7 = vector.load %arg4[%c0_4, %c0_5, %c0_6] : memref<4x64x128xbf16, #tpu.memory_space<vmem>>, vector<4x64x128xbf16>
    %8 = vector.extract_strided_slice %7 {offsets = [0, 0, 0], sizes = [1, 64, 128], strides = [1, 1, 1]} : vector<4x64x128xbf16> to vector<1x64x128xbf16>
    %9 = vector.shape_cast %8 : vector<1x64x128xbf16> to vector<64x128xbf16>
    %10 = vector.extract_strided_slice %6 {offsets = [0, 0], sizes = [128, 128], strides = [1, 1]} : vector<128x512xbf16> to vector<128x128xbf16>
    %cst_7 = arith.constant dense<0.000000e+00> : vector<64x128xf32>
    %11 = tpu.matmul %9, %10, %cst_7 {dimension_numbers = #tpu.dot_dimension_numbers<[1], [0], [0], [1], [0, 0, 1, 1], [], []>} : vector<64x128xbf16>, vector<128x128xbf16>, vector<64x128xf32> -> vector<64x128xf32>
    %12 = vector.extract_strided_slice %7 {offsets = [1, 0, 0], sizes = [1, 64, 128], strides = [1, 1, 1]} : vector<4x64x128xbf16> to vector<1x64x128xbf16>
    %13 = vector.shape_cast %12 : vector<1x64x128xbf16> to vector<64x128xbf16>
    %14 = vector.extract_strided_slice %6 {offsets = [0, 128], sizes = [128, 128], strides = [1, 1]} : vector<128x512xbf16> to vector<128x128xbf16>
    %cst_8 = arith.constant dense<0.000000e+00> : vector<64x128xf32>
    %15 = tpu.matmul %13, %14, %cst_8 {dimension_numbers = #tpu.dot_dimension_numbers<[1], [0], [0], [1], [0, 0, 1, 1], [], []>} : vector<64x128xbf16>, vector<128x128xbf16>, vector<64x128xf32> -> vector<64x128xf32>
    %16 = arith.addf %11, %15 : vector<64x128xf32>
    %17 = vector.extract_strided_slice %7 {offsets = [2, 0, 0], sizes = [1, 64, 128], strides = [1, 1, 1]} : vector<4x64x128xbf16> to vector<1x64x128xbf16>
    %18 = vector.shape_cast %17 : vector<1x64x128xbf16> to vector<64x128xbf16>
    %19 = vector.extract_strided_slice %6 {offsets = [0, 256], sizes = [128, 128], strides = [1, 1]} : vector<128x512xbf16> to vector<128x128xbf16>
    %cst_9 = arith.constant dense<0.000000e+00> : vector<64x128xf32>
    %20 = tpu.matmul %18, %19, %cst_9 {dimension_numbers = #tpu.dot_dimension_numbers<[1], [0], [0], [1], [0, 0, 1, 1], [], []>} : vector<64x128xbf16>, vector<128x128xbf16>, vector<64x128xf32> -> vector<64x128xf32>
    %21 = arith.addf %16, %20 : vector<64x128xf32>
    %22 = vector.extract_strided_slice %7 {offsets = [3, 0, 0], sizes = [1, 64, 128], strides = [1, 1, 1]} : vector<4x64x128xbf16> to vector<1x64x128xbf16>
    %23 = vector.shape_cast %22 : vector<1x64x128xbf16> to vector<64x128xbf16>
    %24 = vector.extract_strided_slice %6 {offsets = [0, 384], sizes = [128, 128], strides = [1, 1]} : vector<128x512xbf16> to vector<128x128xbf16>
    %cst_10 = arith.constant dense<0.000000e+00> : vector<64x128xf32>
    %25 = tpu.matmul %23, %24, %cst_10 {dimension_numbers = #tpu.dot_dimension_numbers<[1], [0], [0], [1], [0, 0, 1, 1], [], []>} : vector<64x128xbf16>, vector<128x128xbf16>, vector<64x128xf32> -> vector<64x128xf32>
    %26 = arith.addf %21, %25 : vector<64x128xf32>
    %c0_11 = arith.constant 0 : index
    %c0_12 = arith.constant 0 : index
    %27 = vector.load %arg10[%c0_11, %c0_12] : memref<64x128xf32, #tpu.memory_space<vmem>>, vector<64x128xf32>
    %28 = arith.addf %27, %26 : vector<64x128xf32>
    %c0_13 = arith.constant 0 : index
    %c0_14 = arith.constant 0 : index
    %29 = vector.load %arg10[%c0_13, %c0_14] : memref<64x128xf32, #tpu.memory_space<vmem>>, vector<64x128xf32>
    tpu.vector_store %arg10[%c0_13, %c0_14], %28 {strides = array<i32>} : memref<64x128xf32, #tpu.memory_space<vmem>>, vector<64x128xf32>,
    %c1_i32 = arith.constant 1 : i32
    %30 = arith.cmpi eq, %arg1, %c1_i32 : i32
    %31 = arith.extui %30 : i1 to i32
    %c0_i32_15 = arith.constant 0 : i32
    %32 = arith.cmpi ne, %31, %c0_i32_15 : i32
    scf.if %32 {
      %c0_16 = arith.constant 0 : index
      %c0_17 = arith.constant 0 : index
      %33 = vector.load %arg10[%c0_16, %c0_17] : memref<64x128xf32, #tpu.memory_space<vmem>>, vector<64x128xf32>
      %cst_18 = arith.constant 0.000000e+00 : f32
      %34 = vector.broadcast %cst_18 : f32 to vector<64x128xf32>
      %35 = arith.maximumf %33, %34 : vector<64x128xf32>
      %c0_19 = arith.constant 0 : index
      %c0_20 = arith.constant 0 : index
      %36 = vector.load %arg9[%c0_19, %c0_20] : memref<64x128xf32, #tpu.memory_space<vmem>>, vector<64x128xf32>
      tpu.vector_store %arg9[%c0_19, %c0_20], %35 {strides = array<i32>} : memref<64x128xf32, #tpu.memory_space<vmem>>, vector<64x128xf32>,
    } else {
    }
    return
  }
  func.func @transform_0(%arg0: i32, %arg1: i32) -> (i32, i32) {
    %c0_i32 = arith.constant 0 : i32
    %c0_i32_0 = arith.constant 0 : i32
    return %arg1, %c0_i32 : i32, i32
  }
  func.func @transform_1(%arg0: i32, %arg1: i32) -> (i32, i32) {
    %c0_i32 = arith.constant 0 : i32
    %c0_i32_0 = arith.constant 0 : i32
    return %arg0, %c0_i32 : i32, i32
  }
  func.func @transform_2(%arg0: i32, %arg1: i32) -> (i32, i32, i32) {
    %c0_i32 = arith.constant 0 : i32
    %c0_i32_0 = arith.constant 0 : i32
    return %c0_i32, %arg0, %arg1 : i32, i32, i32
  }
  func.func @transform_3(%arg0: i32, %arg1: i32) -> (i32, i32) {
    %c0_i32 = arith.constant 0 : i32
    %c0_i32_0 = arith.constant 0 : i32
    %c0_i32_1 = arith.constant 0 : i32
    return %c0_i32, %c0_i32_0 : i32, i32
  }
  func.func @transform_4(%arg0: i32, %arg1: i32) -> (i32, i32) {
    %c0_i32 = arith.constant 0 : i32
    %c0_i32_0 = arith.constant 0 : i32
    %c0_i32_1 = arith.constant 0 : i32
    return %c0_i32, %c0_i32_0 : i32, i32
  }
  func.func @transform_5(%arg0: i32, %arg1: i32) -> (i32, i32) {
    %c0_i32 = arith.constant 0 : i32
    %c0_i32_0 = arith.constant 0 : i32
    return %arg0, %c0_i32 : i32, i32
  }
  func.func @transform_6(%arg0: i32, %arg1: i32) -> (i32, i32) {
    %c0_i32 = arith.constant 0 : i32
    %c0_i32_0 = arith.constant 0 : i32
    return %arg0, %c0_i32 : i32, i32
  }
  func.func @transform_7(%arg0: i32, %arg1: i32) -> (i32, i32) {
    %c0_i32 = arith.constant 0 : i32
    %c0_i32_0 = arith.constant 0 : i32
    return %arg0, %c0_i32 : i32, i32
  }
}

</mosaic_0001>

<llo_original>
// kernel: tpu_custom_call.1
$region0: #{tpu_custom_call.1}
  #allocation0 [shape = 'u32[]', space=smem, size = 0x4, offset = 0x4, fixed_abs, tag = 'smem constant byte address 0x4 - core index']
  #allocation1 [shape = 'u32[144,128]{1,0:T(1,128)}', space=vmem, size = 0x12000, scoped, tag = 'internal scratch']
  #allocation2 [shape = 'f32[64,128]{1,0:T(8,128)}', space=vmem, size = 0x8000, scoped, tag = 'scratch operand']
  #allocation7 [shape = 's32[]', space=sflag, size = 0x4, offset = 0, fixed_abs, tag = 'sflag constant byte address 0x0 - dummy sync flag']
  %s0 = inlined_call_operand.vmem [shape: bf16[256,16], index: 0, kind: input, shape index: {}]
  %s1 = inlined_call_operand.vmem [shape: bf16[128,16], index: 1, kind: input, shape index: {}]
  %s2 = inlined_call_operand.hbm [shape: bf16[4,128,256], index: 2, kind: input, shape index: {}]
  %s3 = inlined_call_operand.vmem [shape: bf16[16,512], index: 3, kind: input, shape index: {}]
  %s4 = inlined_call_operand.vmem [shape: bf16[16,384], index: 4, kind: input, shape index: {}]
  %s5 = inlined_call_operand.vmem [shape: f32[128,128], index: 5, kind: input, shape index: {}]
  %s6 = inlined_call_operand.vmem [shape: f32[128,3], index: 6, kind: input, shape index: {}]
  %s7 = inlined_call_operand.hbm [shape: f32[128,128], index: 7, kind: output, shape index: {}]
  %s8 = sld [smem:[#allocation0]]
  $region73: #{tpu_custom_call.1} parent=0
    _
  %s10 = ssub.s32 1, %s8
  %s11 = scalar_select 0, %s10, %s8
  $region1: #{tpu_custom_call.1} parent=0
    #allocation3 [shape = 'u8[131072]{0}', space=vmem, size = 0x20000, scoped, tag = 'input window, operand 2']
    #allocation4 [shape = 's32[2]{0}', space=sflag, size = 0x8, scoped, tag = 'scoped memory for tpu_custom_call.1']
    #allocation5 [shape = 's32[2]{0}', space=sflag, size = 0x8, scoped, tag = 'scoped memory for tpu_custom_call.1']
    #allocation6 [shape = 'u8[65536]{0}', space=vmem, size = 0x10000, scoped, tag = 'output window, operand 0']
    %12 = vsyncpa [#allocation4], 0
    %s13 = scalar_lea.sflag [#allocation4], 1
    %14 = vsyncpa %s13, 0
    %15 = vsyncpa [#allocation5], 0
    %s16 = scalar_lea.sflag [#allocation5], 1
    %17 = vsyncpa %s16, 0
    loop: start=0, step=1, limit=6
    $region2: #{tpu_custom_call.1} parent=1 // loop_pre_header
      _
    $region3: #{tpu_custom_call.1} parent=1 // loop_header
      %s19 = sphi 0, %s23
      %p20 = scmp.ge.s32.totalorder %s19, 6
      %s26 = sphi 0, %s38
      %s27 = sphi 0, %s34
      %s28 = sphi 0, %s26
      %s29 = sphi 0, %s27
      %s30 = sphi 0, %s28
      %s31 = sphi 0, %s29
      %s41 = sphi 0, %s43
      %s44 = sphi 0, %s41
      %s45 = sphi 0, %s44
      %s61 = sphi 0, %s45
      %s67 = sphi 0, %s69
      %s70 = sphi 0, %s67
      %s71 = sphi 0, %s70
      %s87 = sphi 0, %s71
      %s95 = sphi 0, %s97
      %s98 = sphi 0, %s95
      %s99 = sphi 0, %s98
      %s115 = sphi 0, %s99
      %s119 = sphi 0, %s119
      %s121 = sphi 0, %s119
      %s122 = sphi 0, %s121
      %s136 = sphi 0, %s122
      %s140 = sphi 0, %s140
      %s142 = sphi 0, %s140
      %s143 = sphi 0, %s142
      %s157 = sphi 0, %s143
      %s163 = sphi 0, %s165
      %s166 = sphi 0, %s163
      %s167 = sphi 0, %s166
      %s183 = sphi 0, %s167
      %s189 = sphi 0, %s191
      %s192 = sphi 0, %s189
      %s193 = sphi 0, %s192
      %s209 = sphi 0, %s193
      %s215 = sphi 0, %s217
      %s218 = sphi 0, %s215
      %s219 = sphi 0, %s218
      %s235 = sphi 0, %s219
    $region4: #{tpu_custom_call.1} parent=1 // loop_header_branch
      %22 = sbr.rel (%p20) target = $region8
    $region5: #{tpu_custom_call.1} parent=1 // loop_body
      %s24 = ssub.s32 %s19, 1
      %s25 = ssub.s32 %s19, 2
      %s32 = sadd.s32 1, %s27
      %p33 = scmp.ge.s32.totalorder %s32, 2
      %s34 = scalar_select %p33, 0, %s32
      %s35 = sadd.s32 1, %s26
      %s36 = scalar_select %p33, %s35, %s26
      %p37 = scmp.ge.s32.totalorder %s36, 2
      %s38 = scalar_select %p37, 0, %s36
      %s39 = ssub.s32 %s27, %s34
      %p40 = scmp.eq.s32.totalorder %s39, 0
      %s42 = sadd.s32 %s41, 1
      %s43 = scalar_select %p40, %s41, %s42
      %p46 = pneg %p40
      %p47 = scmp.eq.s32.totalorder %s19, 3
      %p48 = por %p46, %p47
      %p49 = scmp.ne.s32.totalorder %s41, %s44
      %p50 = scmp.eq.s32.totalorder %s19, 0
      %p51 = por %p49, %p50
      %p52 = scmp.ne.s32.totalorder %s41, %s44
      %p53 = scmp.eq.s32.totalorder %s24, 3
      %p54 = por %p52, %p53
      %p55 = scmp.ne.s32.totalorder %s44, %s45
      %p56 = scmp.eq.s32.totalorder %s24, 0
      %p57 = por %p55, %p56
      %p58 = scmp.ne.s32.totalorder %s44, %s45
      %p59 = scmp.eq.s32.totalorder %s25, 3
      %p60 = por %p58, %p59
      %p62 = scmp.ne.s32.totalorder %s45, %s61
      %p63 = scmp.eq.s32.totalorder %s25, 0
      %p64 = por %p62, %p63
      %s65 = ssub.s32 %s26, %s38
      %p66 = scmp.eq.s32.totalorder %s65, 0
      %s68 = sadd.s32 %s67, 1
      %s69 = scalar_select %p66, %s67, %s68
      %p72 = pneg %p66
      %p73 = scmp.eq.s32.totalorder %s19, 3
      %p74 = por %p72, %p73
      %p75 = scmp.ne.s32.totalorder %s67, %s70
      %p76 = scmp.eq.s32.totalorder %s19, 0
      %p77 = por %p75, %p76
      %p78 = scmp.ne.s32.totalorder %s67, %s70
      %p79 = scmp.eq.s32.totalorder %s24, 3
      %p80 = por %p78, %p79
      %p81 = scmp.ne.s32.totalorder %s70, %s71
      %p82 = scmp.eq.s32.totalorder %s24, 0
      %p83 = por %p81, %p82
      %p84 = scmp.ne.s32.totalorder %s70, %s71
      %p85 = scmp.eq.s32.totalorder %s25, 3
      %p86 = por %p84, %p85
      %p88 = scmp.ne.s32.totalorder %s71, %s87
      %p89 = scmp.eq.s32.totalorder %s25, 0
      %p90 = por %p88, %p89
      %s91 = ssub.s32 %s26, %s38
      %s92 = ssub.s32 %s27, %s34
      %s93 = sor.u32 %s91, %s92
      %p94 = scmp.eq.s32.totalorder %s93, 0
      %s96 = sadd.s32 %s95, 1
      %s97 = scalar_select %p94, %s95, %s96
      %p100 = pneg %p94
      %p101 = scmp.eq.s32.totalorder %s19, 3
      %p102 = por %p100, %p101
      %p103 = scmp.ne.s32.totalorder %s95, %s98
      %p104 = scmp.eq.s32.totalorder %s19, 0
      %p105 = por %p103, %p104
      %p106 = scmp.ne.s32.totalorder %s95, %s98
      %p107 = scmp.eq.s32.totalorder %s24, 3
      %p108 = por %p106, %p107
      %p109 = scmp.ne.s32.totalorder %s98, %s99
      %p110 = scmp.eq.s32.totalorder %s24, 0
      %p111 = por %p109, %p110
      %p112 = scmp.ne.s32.totalorder %s98, %s99
      %p113 = scmp.eq.s32.totalorder %s25, 3
      %p114 = por %p112, %p113
      %p116 = scmp.ne.s32.totalorder %s99, %s115
      %p117 = scmp.eq.s32.totalorder %s25, 0
      %p118 = por %p116, %p117
      %s120 = sadd.s32 %s119, 1
      %p123 = scmp.eq.s32.totalorder %s19, 3
      %p124 = scmp.ne.s32.totalorder %s119, %s121
      %p125 = scmp.eq.s32.totalorder %s19, 0
      %p126 = por %p124, %p125
      %p127 = scmp.ne.s32.totalorder %s119, %s121
      %p128 = scmp.eq.s32.totalorder %s24, 3
      %p129 = por %p127, %p128
      %p130 = scmp.ne.s32.totalorder %s121, %s122
      %p131 = scmp.eq.s32.totalorder %s24, 0
      %p132 = por %p130, %p131
      %p133 = scmp.ne.s32.totalorder %s121, %s122
      %p134 = scmp.eq.s32.totalorder %s25, 3
      %p135 = por %p133, %p134
      %p137 = scmp.ne.s32.totalorder %s122, %s136
      %p138 = scmp.eq.s32.totalorder %s25, 0
      %p139 = por %p137, %p138
      %s141 = sadd.s32 %s140, 1
      %p144 = scmp.eq.s32.totalorder %s19, 3
      %p145 = scmp.ne.s32.totalorder %s140, %s142
      %p146 = scmp.eq.s32.totalorder %s19, 0
      %p147 = por %p145, %p146
      %p148 = scmp.ne.s32.totalorder %s140, %s142
      %p149 = scmp.eq.s32.totalorder %s24, 3
      %p150 = por %p148, %p149
      %p151 = scmp.ne.s32.totalorder %s142, %s143
      %p152 = scmp.eq.s32.totalorder %s24, 0
      %p153 = por %p151, %p152
      %p154 = scmp.ne.s32.totalorder %s142, %s143
      %p155 = scmp.eq.s32.totalorder %s25, 3
      %p156 = por %p154, %p155
      %p158 = scmp.ne.s32.totalorder %s143, %s157
      %p159 = scmp.eq.s32.totalorder %s25, 0
      %p160 = por %p158, %p159
      %s161 = ssub.s32 %s26, %s38
      %p162 = scmp.eq.s32.totalorder %s161, 0
      %s164 = sadd.s32 %s163, 1
      %s165 = scalar_select %p162, %s163, %s164
      %p168 = pneg %p162
      %p169 = scmp.eq.s32.totalorder %s19, 3
      %p170 = por %p168, %p169
      %p171 = scmp.ne.s32.totalorder %s163, %s166
      %p172 = scmp.eq.s32.totalorder %s19, 0
      %p173 = por %p171, %p172
      %p174 = scmp.ne.s32.totalorder %s163, %s166
      %p175 = scmp.eq.s32.totalorder %s24, 3
      %p176 = por %p174, %p175
      %p177 = scmp.ne.s32.totalorder %s166, %s167
      %p178 = scmp.eq.s32.totalorder %s24, 0
      %p179 = por %p177, %p178
      %p180 = scmp.ne.s32.totalorder %s166, %s167
      %p181 = scmp.eq.s32.totalorder %s25, 3
      %p182 = por %p180, %p181
      %p184 = scmp.ne.s32.totalorder %s167, %s183
      %p185 = scmp.eq.s32.totalorder %s25, 0
      %p186 = por %p184, %p185
      %s187 = ssub.s32 %s26, %s38
      %p188 = scmp.eq.s32.totalorder %s187, 0
      %s190 = sadd.s32 %s189, 1
      %s191 = scalar_select %p188, %s189, %s190
      %p194 = pneg %p188
      %p195 = scmp.eq.s32.totalorder %s19, 3
      %p196 = por %p194, %p195
      %p197 = scmp.ne.s32.totalorder %s189, %s192
      %p198 = scmp.eq.s32.totalorder %s19, 0
      %p199 = por %p197, %p198
      %p200 = scmp.ne.s32.totalorder %s189, %s192
      %p201 = scmp.eq.s32.totalorder %s24, 3
      %p202 = por %p200, %p201
      %p203 = scmp.ne.s32.totalorder %s192, %s193
      %p204 = scmp.eq.s32.totalorder %s24, 0
      %p205 = por %p203, %p204
      %p206 = scmp.ne.s32.totalorder %s192, %s193
      %p207 = scmp.eq.s32.totalorder %s25, 3
      %p208 = por %p206, %p207
      %p210 = scmp.ne.s32.totalorder %s193, %s209
      %p211 = scmp.eq.s32.totalorder %s25, 0
      %p212 = por %p210, %p211
      %s213 = ssub.s32 %s26, %s38
      %p214 = scmp.eq.s32.totalorder %s213, 0
      %s216 = sadd.s32 %s215, 1
      %s217 = scalar_select %p214, %s215, %s216
      %p220 = pneg %p214
      %p221 = scmp.eq.s32.totalorder %s19, 3
      %p222 = por %p220, %p221
      %p223 = scmp.ne.s32.totalorder %s215, %s218
      %p224 = scmp.eq.s32.totalorder %s19, 0
      %p225 = por %p223, %p224
      %p226 = scmp.ne.s32.totalorder %s215, %s218
      %p227 = scmp.eq.s32.totalorder %s24, 3
      %p228 = por %p226, %p227
      %p229 = scmp.ne.s32.totalorder %s218, %s219
      %p230 = scmp.eq.s32.totalorder %s24, 0
      %p231 = por %p229, %p230
      %p232 = scmp.ne.s32.totalorder %s218, %s219
      %p233 = scmp.eq.s32.totalorder %s25, 3
      %p234 = por %p232, %p233
      %p236 = scmp.ne.s32.totalorder %s219, %s235
      %p237 = scmp.eq.s32.totalorder %s25, 0
      %p238 = por %p236, %p237
      %p239 = scmp.le.s32.totalorder 1, %s19
      %p240 = scmp.lt.s32.totalorder %s19, 5
      %p241 = pnand %p239, %p240
      %p242 = pneg %p241
      // Predicated region
      $region9: #{tpu_custom_call.1} parent=5 // pred_check
        _
      $region10: #{tpu_custom_call.1} parent=5 // pred_check_branch
        %244 = sbr.rel (%p241) target = $region12
      $region11: #{tpu_custom_call.1} parent=5 // pred_region
        %s245 = ssub.s32 %s19, 1
        // Predicated region
        $region13: #{tpu_custom_call.1} parent=11 // pred_check
          %p246 = pneg %p132
        $region14: #{tpu_custom_call.1} parent=11 // pred_check_branch
          %248 = sbr.rel (%p246) target = $region16
        $region15: #{tpu_custom_call.1} parent=11 // pred_region
          _
        $region16: #{tpu_custom_call.1} parent=11 // pred_fallthru
          _
        // Predicated region
        $region17: #{tpu_custom_call.1} parent=11 // pred_check
          %p249 = pneg %p153
        $region18: #{tpu_custom_call.1} parent=11 // pred_check_branch
          %251 = sbr.rel (%p249) target = $region20
        $region19: #{tpu_custom_call.1} parent=11 // pred_region
          _
        $region20: #{tpu_custom_call.1} parent=11 // pred_fallthru
          _
      $region12: #{tpu_custom_call.1} parent=5 // pred_fallthru
        _
      %p252 = scmp.lt.s32.totalorder %s19, 4
      // Predicated region
      $region21: #{tpu_custom_call.1} parent=5 // pred_check
        %p253 = pneg %p252
      $region22: #{tpu_custom_call.1} parent=5 // pred_check_branch
        %255 = sbr.rel (%p253) target = $region24
      $region23: #{tpu_custom_call.1} parent=5 // pred_region
        // Predicated region
        $region25: #{tpu_custom_call.1} parent=23 // pred_check
          %p256 = pneg %p51
        $region26: #{tpu_custom_call.1} parent=23 // pred_check_branch
          %258 = sbr.rel (%p256) target = $region28
        $region27: #{tpu_custom_call.1} parent=23 // pred_region
          %s259 = smul.u32 16, %s27
          %p260 = scmp.lt.s32.totalorder %s259, 31
          %s261 = scalar_select %p260, %s259, 31
          %s262 = smul.addr %s261, 4
          %s263 = scalar_lea.vmem %s0, %s262
          %s264 = smul.u32 16, %s27
        $region28: #{tpu_custom_call.1} parent=23 // pred_fallthru
          _
        // Predicated region
        $region29: #{tpu_custom_call.1} parent=23 // pred_check
          %p265 = pneg %p77
        $region30: #{tpu_custom_call.1} parent=23 // pred_check_branch
          %267 = sbr.rel (%p265) target = $region32
        $region31: #{tpu_custom_call.1} parent=23 // pred_region
          %s268 = smul.u32 8, %s26
          %p269 = scmp.lt.s32.totalorder %s268, 15
          %s270 = scalar_select %p269, %s268, 15
          %s271 = smul.addr %s270, 4
          %s272 = scalar_lea.vmem %s1, %s271
          %s273 = smul.u32 8, %s26
        $region32: #{tpu_custom_call.1} parent=23 // pred_fallthru
          _
        // Predicated region
        $region33: #{tpu_custom_call.1} parent=23 // pred_check
          %p274 = pneg %p105
        $region34: #{tpu_custom_call.1} parent=23 // pred_check_branch
          %276 = sbr.rel (%p274) target = $region36
        $region35: #{tpu_custom_call.1} parent=23 // pred_region
          #allocation8 [shape = 'u32[6]{0}', space=smem, size = 0x18, scoped, tag = 'DMA stride descriptor']
          %s277 = sand.u32 %s95, 1
          %s278 = scalar_lea.sflag [#allocation4], %s277
          %s279 = sand.u32 %s95, 1
          %s280 = smul.addr %s279, 128
          %s281 = scalar_lea.vmem [#allocation3], %s280
          %s282 = smul.u32 8, %s26
          %s284 = ssub.s32 2048, 2048
          %285 = vsyncadd %s278, %s284
          %s286 = smul.addr %s282, 2
          %s287 = sadd.s32 %s27, %s286
          %s288 = smul.addr %s287, 64
          %s289 = scalar_lea.hbm %s2, %s288
          %s291 = sshll.u32 1, 14
          %s292 = sxor.u32 4294967295, %s291
          %s294 = sld [smem:[#allocation0]]
          %s295 = sadd.s32 2, %s294
          %s297 = sshll.u32 7, 26
          %s298 = sxor.u32 4294967295, %s297
          %s299 = sand.u32 0, %s298
          %s300 = sshll.u32 %s295, 26
          %s301 = sor.u32 %s299, %s300
          %s302 = sshll.u32 %s281, 4
          %s303 = int_to_ptr.vmem [resolvable:$true] %s302
          %309 = sst [smem:[#allocation8]] 2048
          %s310 = scalar_lea.smem [#allocation8], 1
          %311 = sst [smem:[%s310]] 512
          %s312 = scalar_lea.smem [#allocation8], 2
          %313 = sst [smem:[%s312]] 8
          %s314 = scalar_lea.smem [#allocation8], 3
          %315 = sst [smem:[%s314]] 128
          %s316 = scalar_lea.smem [#allocation8], 4
          %317 = sst [smem:[%s316]] 64
          %s318 = scalar_lea.smem [#allocation8], 5
          %319 = sst [smem:[%s318]] 4
          %321 = dma.general %s289, 2048, %s303, %s278, [#allocation7], [#allocation8], %s301, 0
        $region36: #{tpu_custom_call.1} parent=23 // pred_fallthru
          _
        // Predicated region
        $region37: #{tpu_custom_call.1} parent=23 // pred_check
          %p322 = pneg %p173
        $region38: #{tpu_custom_call.1} parent=23 // pred_check_branch
          %324 = sbr.rel (%p322) target = $region40
        $region39: #{tpu_custom_call.1} parent=23 // pred_region
          %s325 = smul.u32 8, %s26
          %p326 = scmp.lt.s32.totalorder %s325, 15
          %s327 = scalar_select %p326, %s325, 15
          %s328 = smul.addr %s327, 8
          %s329 = scalar_lea.vmem %s5, %s328
          %s330 = smul.u32 8, %s26
        $region40: #{tpu_custom_call.1} parent=23 // pred_fallthru
          _
        // Predicated region
        $region41: #{tpu_custom_call.1} parent=23 // pred_check
          %p331 = pneg %p199
        $region42: #{tpu_custom_call.1} parent=23 // pred_check_branch
          %333 = sbr.rel (%p331) target = $region44
        $region43: #{tpu_custom_call.1} parent=23 // pred_region
          %s334 = smul.u32 8, %s26
          %p335 = scmp.lt.s32.totalorder %s334, 15
          %s336 = scalar_select %p335, %s334, 15
          %s337 = smul.addr %s336, 8
          %s338 = scalar_lea.vmem %s6, %s337
          %s339 = smul.u32 8, %s26
        $region44: #{tpu_custom_call.1} parent=23 // pred_fallthru
          _
      $region24: #{tpu_custom_call.1} parent=5 // pred_fallthru
        _
      %p340 = scmp.le.s32.totalorder 1, %s19
      %p341 = scmp.lt.s32.totalorder %s19, 5
      %p342 = pnand %p340, %p341
      %p343 = pneg %p342
      // Predicated region
      $region45: #{tpu_custom_call.1} parent=5 // pred_check
        _
      $region46: #{tpu_custom_call.1} parent=5 // pred_check_branch
        %345 = sbr.rel (%p342) target = $region48
      $region47: #{tpu_custom_call.1} parent=5 // pred_region
        %s346 = ssub.s32 %s19, 1
        %s347 = sand.u32 %s98, 1
        %s348 = scalar_lea.sflag [#allocation4], %s347
        %s349 = sand.u32 %s98, 1
        %s350 = smul.addr %s349, 128
        %s351 = scalar_lea.vmem [#allocation3], %s350
        // Predicated region
        $region49: #{tpu_custom_call.1} parent=47 // pred_check
          %p352 = pneg %p111
        $region50: #{tpu_custom_call.1} parent=47 // pred_check_branch
          %354 = sbr.rel (%p352) target = $region52
        $region51: #{tpu_custom_call.1} parent=47 // pred_region
          %355 = dma.done %s348, 2048
        $region52: #{tpu_custom_call.1} parent=47 // pred_fallthru
          _
        %s356 = smul.u32 16, %s29
        %p357 = scmp.lt.s32.totalorder %s356, 31
        %s358 = scalar_select %p357, %s356, 31
        %s359 = smul.addr %s358, 4
        %s360 = scalar_lea.vmem %s0, %s359
        %p361 = pneg %p57
        %p362 = pneg %p54
        %s363 = smul.u32 8, %s28
        %p364 = scmp.lt.s32.totalorder %s363, 15
        %s365 = scalar_select %p364, %s363, 15
        %s366 = smul.addr %s365, 4
        %s367 = scalar_lea.vmem %s1, %s366
        %p368 = pneg %p83
        %p369 = pneg %p80
        %s370 = sand.u32 %s98, 1
        %s371 = scalar_lea.sflag [#allocation4], %s370
        %s372 = sand.u32 %s98, 1
        %s373 = smul.addr %s372, 128
        %s374 = scalar_lea.vmem [#allocation3], %s373
        %p375 = pneg %p111
        %p376 = pneg %p108
        %p377 = pneg %p132
        %p378 = pneg %p129
        %p379 = pneg %p153
        %p380 = pneg %p150
        %s381 = smul.u32 8, %s28
        %p382 = scmp.lt.s32.totalorder %s381, 15
        %s383 = scalar_select %p382, %s381, 15
        %s384 = smul.addr %s383, 8
        %s385 = scalar_lea.vmem %s5, %s384
        %p386 = pneg %p179
        %p387 = pneg %p176
        %s388 = smul.u32 8, %s28
        %p389 = scmp.lt.s32.totalorder %s388, 15
        %s390 = scalar_select %p389, %s388, 15
        %s391 = smul.addr %s390, 8
        %s392 = scalar_lea.vmem %s6, %s391
        %p393 = pneg %p205
        %p394 = pneg %p202
        %p395 = pneg %p231
        %p396 = pneg %p228
        %s397 = sand.u32 %s218, 1
        %s398 = scalar_lea.sflag [#allocation5], %s397
        %s399 = sand.u32 %s218, 1
        %s400 = smul.addr %s399, 64
        %s401 = scalar_lea.vmem [#allocation6], %s400
        %s402 = smul.u32 16, %s29
        %p403 = scmp.lt.s32.totalorder %s402, 31
        %s404 = scalar_select %p403, %s402, 31
        %s405 = smul.addr %s404, 4
        %s406 = scalar_lea.vmem %s0, %s405
        %s407 = smul.u32 16, %s29
        %s408 = smul.u32 8, %s28
        %p409 = scmp.lt.s32.totalorder %s408, 15
        %s410 = scalar_select %p409, %s408, 15
        %s411 = smul.addr %s410, 4
        %s412 = scalar_lea.vmem %s1, %s411
        %s413 = smul.u32 8, %s28
        %s414 = smul.u32 8, %s28
        %s415 = smul.u32 8, %s28
        %p416 = scmp.lt.s32.totalorder %s415, 15
        %s417 = scalar_select %p416, %s415, 15
        %s418 = smul.addr %s417, 8
        %s419 = scalar_lea.vmem %s5, %s418
        %s420 = smul.u32 8, %s28
        %s421 = smul.u32 8, %s28
        %p422 = scmp.lt.s32.totalorder %s421, 15
        %s423 = scalar_select %p422, %s421, 15
        %s424 = smul.addr %s423, 8
        %s425 = scalar_lea.vmem %s6, %s424
        %s426 = smul.u32 8, %s28
        %s427 = smul.u32 8, %s28
        %p429 = scmp.eq.s32.totalorder %s29, 0
        // Predicated region
        $region53: #{tpu_custom_call.1} parent=47 // pred_check
          %p430 = pneg %p429
        $region54: #{tpu_custom_call.1} parent=47 // pred_check_branch
          %432 = sbr.rel (%p430) target = $region56
        $region55: #{tpu_custom_call.1} parent=47 // pred_region
          %v433 = vld [vmem:[%s412] sm:$0xf]
          %v434 = vld [vmem:[%s412 + $0x4] sm:$0xf]
          %v435 = vld [vmem:[%s412 + $0x8] sm:$0xf]
          %v436 = vld [vmem:[%s412 + $0xc] sm:$0xf]
          %v437 = vld [vmem:[%s412 + $0x10] sm:$0xf]
          %v438 = vld [vmem:[%s412 + $0x14] sm:$0xf]
          %v439 = vld [vmem:[%s412 + $0x18] sm:$0xf]
          %v440 = vld [vmem:[%s412 + $0x1c] sm:$0xf]
          %v441 = vld [vmem:[%s4] sm:$0xff]
          %v442 = vld [vmem:[%s4 + $0x8] sm:$0xf]
          %v443 = vld [vmem:[%s4 + $0xc] sm:$0xff]
          %v444 = vld [vmem:[%s4 + $0x14] sm:$0xf]
          %v453 = vunpack.c.l.b16 %v433
          %v454 = vunpack.c.l.b16 %v434
          %v455 = vunpack.c.l.b16 %v435
          %v456 = vunpack.c.l.b16 %v436
          %v457 = vunpack.c.l.b16 %v437
          %v458 = vunpack.c.l.b16 %v438
          %v459 = vunpack.c.l.b16 %v439
          %v460 = vunpack.c.l.b16 %v440
          %v461 = vpack.c.b16 %v454, %v453
          %v462 = vpack.c.b16 %v456, %v455
          %v463 = vpack.c.b16 %v458, %v457
          %v464 = vpack.c.b16 %v460, %v459
          %v469 = vunpack.c.l.b16 %v441
          %v470 = vunpack.c.h.b16 %v441
          %v471 = vunpack.c.l.b16 %v442
          %v472 = vunpack.c.l.b16 %v443
          %v473 = vunpack.c.h.b16 %v443
          %v474 = vunpack.c.l.b16 %v444
          %v475 = vpack.c.b16 %v472, %v469
          %v476 = vpack.c.b16 %v473, %v470
          %v477 = vpack.c.b16 %v474, %v471
          %vm481 = vcmask 130048
          %v483 = vsel %vm481, %v461, 0
          %v486 = vsel %vm481, %v462, 0
          %v489 = vsel %vm481, %v463, 0
          %v492 = vsel %vm481, %v464, 0
          %494 = vmatprep.subr.bf16.mxu0 %v476
          %495 = vmatpush1.bf16.msra.mxu0 %v475
          %496 = vmatprep.subr.bf16.mxu0 0
          %497 = vmatpush1.bf16.msra.mxu0 0
          %498 = vmatprep.subr.bf16.mxu0 0
          %499 = vmatpush1.bf16.msra.mxu0 0
          %500 = vmatprep.subr.bf16.mxu0 0
          %501 = vmatpush1.bf16.msra.mxu0 0
          %502 = vmatprep.subr.bf16.mxu0 0
          %503 = vmatpush1.bf16.msra.mxu0 0
          %504 = vmatprep.subr.bf16.mxu0 0
          %505 = vmatpush1.bf16.msra.mxu0 0
          %506 = vmatprep.subr.bf16.mxu0 0
          %507 = vmatpush1.bf16.msra.mxu0 0
          %508 = vmatprep.subr.bf16.mxu0 0
          %509 = vmatpush1.bf16.msra.mxu0 0
          %510 = vmatprep.subr.bf16.mxu0 0
          %511 = vmatpush1.bf16.msra.mxu0 0
          %512 = vmatprep.subr.bf16.mxu0 0
          %513 = vmatpush1.bf16.msra.mxu0 0
          %514 = vmatprep.subr.bf16.mxu0 0
          %515 = vmatpush1.bf16.msra.mxu0 0
          %516 = vmatprep.subr.bf16.mxu0 0
          %517 = vmatpush1.bf16.msra.mxu0 0
          %518 = vmatprep.subr.bf16.mxu0 0
          %519 = vmatpush1.bf16.msra.mxu0 0
          %520 = vmatprep.subr.bf16.mxu0 0
          %521 = vmatpush1.bf16.msra.mxu0 0
          %522 = vmatprep.subr.bf16.mxu0 0
          %523 = vmatpush1.bf16.msra.mxu0 0
          %524 = vmatprep.subr.bf16.mxu0 0
          %525 = vmatpush1.bf16.msra.mxu0 0
          %526 = vmatprep.mubr.bf16.mxu0 0
          %527 = vmatmul.mubr.bf16.gmra.mrb[0].mxu0 %v483
          %v528 = vpop.f32.mrb[0].mxu0
          %v529 = vadd.f32 0.0, %v528
          %v530 = vpop.f32.mrb[0].mxu0
          %v531 = vadd.f32 0.0, %v530
          %v532 = vpop.f32.mrb[0].mxu0
          %v533 = vadd.f32 0.0, %v532
          %v534 = vpop.f32.mrb[0].mxu0
          %v535 = vadd.f32 0.0, %v534
          %536 = vmatprep.mubr.bf16.mxu0 0
          %537 = vmatmul.mubr.bf16.gmra.mrb[0].mxu0 %v486
          %v538 = vpop.f32.mrb[0].mxu0
          %v539 = vadd.f32 0.0, %v538
          %v540 = vpop.f32.mrb[0].mxu0
          %v541 = vadd.f32 0.0, %v540
          %v542 = vpop.f32.mrb[0].mxu0
          %v543 = vadd.f32 0.0, %v542
          %v544 = vpop.f32.mrb[0].mxu0
          %v545 = vadd.f32 0.0, %v544
          %546 = vmatprep.mubr.bf16.mxu0 0
          %547 = vmatmul.mubr.bf16.gmra.mrb[0].mxu0 %v489
          %v548 = vpop.f32.mrb[0].mxu0
          %v549 = vadd.f32 0.0, %v548
          %v550 = vpop.f32.mrb[0].mxu0
          %v551 = vadd.f32 0.0, %v550
          %v552 = vpop.f32.mrb[0].mxu0
          %v553 = vadd.f32 0.0, %v552
          %v554 = vpop.f32.mrb[0].mxu0
          %v555 = vadd.f32 0.0, %v554
          %556 = vmatprep.mubr.bf16.mxu0 0
          %557 = vmatmul.mubr.bf16.gmra.mrb[0].mxu0 %v492
          %v558 = vpop.f32.mrb[0].mxu0
          %v559 = vadd.f32 0.0, %v558
          %v560 = vpop.f32.mrb[0].mxu0
          %v561 = vadd.f32 0.0, %v560
          %v562 = vpop.f32.mrb[0].mxu0
          %v563 = vadd.f32 0.0, %v562
          %v564 = vpop.f32.mrb[0].mxu0
          %v565 = vadd.f32 0.0, %v564
          %566 = vdwg.mxu0
          %567 = vmatprep.subr.bf16.mxu0 0
          %568 = vmatpush1.bf16.msra.mxu0 %v477
          %569 = vmatprep.subr.bf16.mxu0 0
          %570 = vmatpush1.bf16.msra.mxu0 0
          %571 = vmatprep.subr.bf16.mxu0 0
          %572 = vmatpush1.bf16.msra.mxu0 0
          %573 = vmatprep.subr.bf16.mxu0 0
          %574 = vmatpush1.bf16.msra.mxu0 0
          %575 = vmatprep.subr.bf16.mxu0 0
          %576 = vmatpush1.bf16.msra.mxu0 0
          %577 = vmatprep.subr.bf16.mxu0 0
          %578 = vmatpush1.bf16.msra.mxu0 0
          %579 = vmatprep.subr.bf16.mxu0 0
          %580 = vmatpush1.bf16.msra.mxu0 0
          %581 = vmatprep.subr.bf16.mxu0 0
          %582 = vmatpush1.bf16.msra.mxu0 0
          %583 = vmatprep.subr.bf16.mxu0 0
          %584 = vmatpush1.bf16.msra.mxu0 0
          %585 = vmatprep.subr.bf16.mxu0 0
          %586 = vmatpush1.bf16.msra.mxu0 0
          %587 = vmatprep.subr.bf16.mxu0 0
          %588 = vmatpush1.bf16.msra.mxu0 0
          %589 = vmatprep.subr.bf16.mxu0 0
          %590 = vmatpush1.bf16.msra.mxu0 0
          %591 = vmatprep.subr.bf16.mxu0 0
          %592 = vmatpush1.bf16.msra.mxu0 0
          %593 = vmatprep.subr.bf16.mxu0 0
          %594 = vmatpush1.bf16.msra.mxu0 0
          %595 = vmatprep.subr.bf16.mxu0 0
          %596 = vmatpush1.bf16.msra.mxu0 0
          %597 = vmatprep.subr.bf16.mxu0 0
          %598 = vmatpush1.bf16.msra.mxu0 0
          %599 = vmatprep.mubr.bf16.mxu0 0
          %600 = vmatmul.mubr.bf16.gmra.mrb[0].mxu0 %v483
          %v601 = vpop.f32.mrb[0].mxu0
          %v602 = vadd.f32 0.0, %v601
          %v603 = vpop.f32.mrb[0].mxu0
          %v604 = vpop.f32.mrb[0].mxu0
          %v605 = vadd.f32 0.0, %v604
          %v606 = vpop.f32.mrb[0].mxu0
          %607 = vmatprep.mubr.bf16.mxu0 0
          %608 = vmatmul.mubr.bf16.gmra.mrb[0].mxu0 %v486
          %v609 = vpop.f32.mrb[0].mxu0
          %v610 = vadd.f32 0.0, %v609
          %v611 = vpop.f32.mrb[0].mxu0
          %v612 = vpop.f32.mrb[0].mxu0
          %v613 = vadd.f32 0.0, %v612
          %v614 = vpop.f32.mrb[0].mxu0
          %615 = vmatprep.mubr.bf16.mxu0 0
          %616 = vmatmul.mubr.bf16.gmra.mrb[0].mxu0 %v489
          %v617 = vpop.f32.mrb[0].mxu0
          %v618 = vadd.f32 0.0, %v617
          %v619 = vpop.f32.mrb[0].mxu0
          %v620 = vpop.f32.mrb[0].mxu0
          %v621 = vadd.f32 0.0, %v620
          %v622 = vpop.f32.mrb[0].mxu0
          %623 = vmatprep.mubr.bf16.mxu0 0
          %624 = vmatmul.mubr.bf16.gmra.mrb[0].mxu0 %v492
          %v625 = vpop.f32.mrb[0].mxu0
          %v626 = vadd.f32 0.0, %v625
          %v627 = vpop.f32.mrb[0].mxu0
          %v628 = vpop.f32.mrb[0].mxu0
          %v629 = vadd.f32 0.0, %v628
          %v630 = vpop.f32.mrb[0].mxu0
          %631 = vdwg.mxu0
          %v632 = vld [vmem:[%s419] sm:$0xff]
          %v633 = vld [vmem:[%s419 + $0x8] sm:$0xff]
          %v634 = vld [vmem:[%s419 + $0x10] sm:$0xff]
          %v635 = vld [vmem:[%s419 + $0x18] sm:$0xff]
          %v636 = vld [vmem:[%s419 + $0x20] sm:$0xff]
          %v637 = vld [vmem:[%s419 + $0x28] sm:$0xff]
          %v638 = vld [vmem:[%s419 + $0x30] sm:$0xff]
          %v639 = vld [vmem:[%s419 + $0x38] sm:$0xff]
          %v640 = vld [vmem:[%s425] sm:$0xff]
          %v641 = vld [vmem:[%s425 + $0x8] sm:$0xff]
          %v642 = vld [vmem:[%s425 + $0x10] sm:$0xff]
          %v643 = vld [vmem:[%s425 + $0x18] sm:$0xff]
          %v644 = vld [vmem:[%s425 + $0x20] sm:$0xff]
          %v645 = vld [vmem:[%s425 + $0x28] sm:$0xff]
          %v646 = vld [vmem:[%s425 + $0x30] sm:$0xff]
          %v647 = vld [vmem:[%s425 + $0x38] sm:$0xff]
          %649 = vset.pattern.permute.xlu0 0
          %650 = vperm.xlu0 %649, %v640
          %v651 = vpop.permute.xlu0 %650
          %654 = vset.pattern.permute.xlu0 0
          %655 = vperm.xlu0 %654, %v641
          %v656 = vpop.permute.xlu0 %655
          %659 = vset.pattern.permute.xlu0 0
          %660 = vperm.xlu0 %659, %v642
          %v661 = vpop.permute.xlu0 %660
          %664 = vset.pattern.permute.xlu0 0
          %665 = vperm.xlu0 %664, %v643
          %v666 = vpop.permute.xlu0 %665
          %669 = vset.pattern.permute.xlu0 0
          %670 = vperm.xlu0 %669, %v644
          %v671 = vpop.permute.xlu0 %670
          %674 = vset.pattern.permute.xlu0 0
          %675 = vperm.xlu0 %674, %v645
          %v676 = vpop.permute.xlu0 %675
          %679 = vset.pattern.permute.xlu0 0
          %680 = vperm.xlu0 %679, %v646
          %v681 = vpop.permute.xlu0 %680
          %684 = vset.pattern.permute.xlu0 0
          %685 = vperm.xlu0 %684, %v647
          %v686 = vpop.permute.xlu0 %685
          %v688 = vmul.f32 %v651, %v529
          %v689 = vmul.f32 %v656, %v533
          %v690 = vmul.f32 %v661, %v539
          %v691 = vmul.f32 %v666, %v543
          %v692 = vmul.f32 %v671, %v549
          %v693 = vmul.f32 %v676, %v553
          %v694 = vmul.f32 %v681, %v559
          %v695 = vmul.f32 %v686, %v563
          %v696 = vadd.f32 %v632, %v688
          %v697 = vadd.f32 %v633, %v689
          %v698 = vadd.f32 %v634, %v690
          %v699 = vadd.f32 %v635, %v691
          %v700 = vadd.f32 %v636, %v692
          %v701 = vadd.f32 %v637, %v693
          %v702 = vadd.f32 %v638, %v694
          %v703 = vadd.f32 %v639, %v695
          %704 = vset.pattern.permute.xlu0 1
          %705 = vperm.xlu0 %704, %v640
          %v706 = vpop.permute.xlu0 %705
          %708 = vset.pattern.permute.xlu0 1
          %709 = vperm.xlu0 %708, %v641
          %v710 = vpop.permute.xlu0 %709
          %712 = vset.pattern.permute.xlu0 1
          %713 = vperm.xlu0 %712, %v642
          %v714 = vpop.permute.xlu0 %713
          %716 = vset.pattern.permute.xlu0 1
          %717 = vperm.xlu0 %716, %v643
          %v718 = vpop.permute.xlu0 %717
          %720 = vset.pattern.permute.xlu0 1
          %721 = vperm.xlu0 %720, %v644
          %v722 = vpop.permute.xlu0 %721
          %724 = vset.pattern.permute.xlu0 1
          %725 = vperm.xlu0 %724, %v645
          %v726 = vpop.permute.xlu0 %725
          %728 = vset.pattern.permute.xlu0 1
          %729 = vperm.xlu0 %728, %v646
          %v730 = vpop.permute.xlu0 %729
          %732 = vset.pattern.permute.xlu0 1
          %733 = vperm.xlu0 %732, %v647
          %v734 = vpop.permute.xlu0 %733
          %v736 = vmul.f32 %v706, %v531
          %v737 = vmul.f32 %v710, %v535
          %v738 = vmul.f32 %v714, %v541
          %v739 = vmul.f32 %v718, %v545
          %v740 = vmul.f32 %v722, %v551
          %v741 = vmul.f32 %v726, %v555
          %v742 = vmul.f32 %v730, %v561
          %v743 = vmul.f32 %v734, %v565
          %v744 = vadd.f32 %v696, %v736
          %v745 = vadd.f32 %v697, %v737
          %v746 = vadd.f32 %v698, %v738
          %v747 = vadd.f32 %v699, %v739
          %v748 = vadd.f32 %v700, %v740
          %v749 = vadd.f32 %v701, %v741
          %v750 = vadd.f32 %v702, %v742
          %v751 = vadd.f32 %v703, %v743
          %752 = vset.pattern.permute.xlu0 2
          %753 = vperm.xlu0 %752, %v640
          %v754 = vpop.permute.xlu0 %753
          %756 = vset.pattern.permute.xlu0 2
          %757 = vperm.xlu0 %756, %v641
          %v758 = vpop.permute.xlu0 %757
          %760 = vset.pattern.permute.xlu0 2
          %761 = vperm.xlu0 %760, %v642
          %v762 = vpop.permute.xlu0 %761
          %764 = vset.pattern.permute.xlu0 2
          %765 = vperm.xlu0 %764, %v643
          %v766 = vpop.permute.xlu0 %765
          %768 = vset.pattern.permute.xlu0 2
          %769 = vperm.xlu0 %768, %v644
          %v770 = vpop.permute.xlu0 %769
          %772 = vset.pattern.permute.xlu0 2
          %773 = vperm.xlu0 %772, %v645
          %v774 = vpop.permute.xlu0 %773
          %776 = vset.pattern.permute.xlu0 2
          %777 = vperm.xlu0 %776, %v646
          %v778 = vpop.permute.xlu0 %777
          %780 = vset.pattern.permute.xlu0 2
          %781 = vperm.xlu0 %780, %v647
          %v782 = vpop.permute.xlu0 %781
          %v784 = vmul.f32 %v754, %v602
          %v785 = vmul.f32 %v758, %v605
          %v786 = vmul.f32 %v762, %v610
          %v787 = vmul.f32 %v766, %v613
          %v788 = vmul.f32 %v770, %v618
          %v789 = vmul.f32 %v774, %v621
          %v790 = vmul.f32 %v778, %v626
          %v791 = vmul.f32 %v782, %v629
          %v792 = vadd.f32 %v744, %v784
          %v793 = vadd.f32 %v745, %v785
          %v794 = vadd.f32 %v746, %v786
          %v795 = vadd.f32 %v747, %v787
          %v796 = vadd.f32 %v748, %v788
          %v797 = vadd.f32 %v749, %v789
          %v798 = vadd.f32 %v750, %v790
          %v799 = vadd.f32 %v751, %v791
          %800 = vst [vmem:[#allocation2] sm:$0xff] %v792
          %801 = vst [vmem:[#allocation2 + $0x8] sm:$0xff] %v793
          %802 = vst [vmem:[#allocation2 + $0x10] sm:$0xff] %v794
          %803 = vst [vmem:[#allocation2 + $0x18] sm:$0xff] %v795
          %804 = vst [vmem:[#allocation2 + $0x20] sm:$0xff] %v796
          %805 = vst [vmem:[#allocation2 + $0x28] sm:$0xff] %v797
          %806 = vst [vmem:[#allocation2 + $0x30] sm:$0xff] %v798
          %807 = vst [vmem:[#allocation2 + $0x38] sm:$0xff] %v799
        $region56: #{tpu_custom_call.1} parent=47 // pred_fallthru
          _
        %v808 = vld [vmem:[%s406] sm:$0xf]
        %v809 = vld [vmem:[%s406 + $0x4] sm:$0xf]
        %v810 = vld [vmem:[%s406 + $0x8] sm:$0xf]
        %v811 = vld [vmem:[%s406 + $0xc] sm:$0xf]
        %v812 = vld [vmem:[%s406 + $0x10] sm:$0xf]
        %v813 = vld [vmem:[%s406 + $0x14] sm:$0xf]
        %v814 = vld [vmem:[%s406 + $0x18] sm:$0xf]
        %v815 = vld [vmem:[%s406 + $0x1c] sm:$0xf]
        %v816 = vld [vmem:[%s406 + $0x20] sm:$0xf]
        %v817 = vld [vmem:[%s406 + $0x24] sm:$0xf]
        %v818 = vld [vmem:[%s406 + $0x28] sm:$0xf]
        %v819 = vld [vmem:[%s406 + $0x2c] sm:$0xf]
        %v820 = vld [vmem:[%s406 + $0x30] sm:$0xf]
        %v821 = vld [vmem:[%s406 + $0x34] sm:$0xf]
        %v822 = vld [vmem:[%s406 + $0x38] sm:$0xf]
        %v823 = vld [vmem:[%s406 + $0x3c] sm:$0xf]
        %v824 = vld [vmem:[%s3] sm:$0xff]
        %v825 = vld [vmem:[%s3 + $0x8] sm:$0xff]
        %v826 = vld [vmem:[%s3 + $0x10] sm:$0xff]
        %v827 = vld [vmem:[%s3 + $0x18] sm:$0xff]
        %v844 = vunpack.c.l.b16 %v808
        %v845 = vunpack.c.l.b16 %v809
        %v846 = vunpack.c.l.b16 %v810
        %v847 = vunpack.c.l.b16 %v811
        %v848 = vunpack.c.l.b16 %v812
        %v849 = vunpack.c.l.b16 %v813
        %v850 = vunpack.c.l.b16 %v814
        %v851 = vunpack.c.l.b16 %v815
        %v852 = vunpack.c.l.b16 %v816
        %v853 = vunpack.c.l.b16 %v817
        %v854 = vunpack.c.l.b16 %v818
        %v855 = vunpack.c.l.b16 %v819
        %v856 = vunpack.c.l.b16 %v820
        %v857 = vunpack.c.l.b16 %v821
        %v858 = vunpack.c.l.b16 %v822
        %v859 = vunpack.c.l.b16 %v823
        %v860 = vpack.c.b16 %v845, %v844
        %v861 = vpack.c.b16 %v847, %v846
        %v862 = vpack.c.b16 %v849, %v848
        %v863 = vpack.c.b16 %v851, %v850
        %v864 = vpack.c.b16 %v853, %v852
        %v865 = vpack.c.b16 %v855, %v854
        %v866 = vpack.c.b16 %v857, %v856
        %v867 = vpack.c.b16 %v859, %v858
        %v872 = vunpack.c.l.b16 %v824
        %v873 = vunpack.c.h.b16 %v824
        %v874 = vunpack.c.l.b16 %v825
        %v875 = vunpack.c.h.b16 %v825
        %v876 = vunpack.c.l.b16 %v826
        %v877 = vunpack.c.h.b16 %v826
        %v878 = vunpack.c.l.b16 %v827
        %v879 = vunpack.c.h.b16 %v827
        %v880 = vpack.c.b16 %v876, %v872
        %v881 = vpack.c.b16 %v877, %v873
        %v882 = vpack.c.b16 %v878, %v874
        %v883 = vpack.c.b16 %v879, %v875
        %vm888 = vcmask 130048
        %v890 = vsel %vm888, %v860, 0
        %v893 = vsel %vm888, %v861, 0
        %v896 = vsel %vm888, %v862, 0
        %v899 = vsel %vm888, %v863, 0
        %v902 = vsel %vm888, %v864, 0
        %v905 = vsel %vm888, %v865, 0
        %v908 = vsel %vm888, %v866, 0
        %v911 = vsel %vm888, %v867, 0
        %913 = vmatprep.subr.bf16.mxu0 %v881
        %914 = vmatpush1.bf16.msra.mxu0 %v880
        %915 = vmatprep.subr.bf16.mxu0 0
        %916 = vmatpush1.bf16.msra.mxu0 0
        %917 = vmatprep.subr.bf16.mxu0 0
        %918 = vmatpush1.bf16.msra.mxu0 0
        %919 = vmatprep.subr.bf16.mxu0 0
        %920 = vmatpush1.bf16.msra.mxu0 0
        %921 = vmatprep.subr.bf16.mxu0 0
        %922 = vmatpush1.bf16.msra.mxu0 0
        %923 = vmatprep.subr.bf16.mxu0 0
        %924 = vmatpush1.bf16.msra.mxu0 0
        %925 = vmatprep.subr.bf16.mxu0 0
        %926 = vmatpush1.bf16.msra.mxu0 0
        %927 = vmatprep.subr.bf16.mxu0 0
        %928 = vmatpush1.bf16.msra.mxu0 0
        %929 = vmatprep.subr.bf16.mxu0 0
        %930 = vmatpush1.bf16.msra.mxu0 0
        %931 = vmatprep.subr.bf16.mxu0 0
        %932 = vmatpush1.bf16.msra.mxu0 0
        %933 = vmatprep.subr.bf16.mxu0 0
        %934 = vmatpush1.bf16.msra.mxu0 0
        %935 = vmatprep.subr.bf16.mxu0 0
        %936 = vmatpush1.bf16.msra.mxu0 0
        %937 = vmatprep.subr.bf16.mxu0 0
        %938 = vmatpush1.bf16.msra.mxu0 0
        %939 = vmatprep.subr.bf16.mxu0 0
        %940 = vmatpush1.bf16.msra.mxu0 0
        %941 = vmatprep.subr.bf16.mxu0 0
        %942 = vmatpush1.bf16.msra.mxu0 0
        %943 = vmatprep.subr.bf16.mxu0 0
        %944 = vmatpush1.bf16.msra.mxu0 0
        %945 = vmatprep.mubr.bf16.mxu0 0
        %946 = vmatmul.mubr.bf16.gmra.mrb[0].mxu0 %v890
        %v947 = vpop.f32.mrb[0].mxu0
        %v948 = vadd.f32 0.0, %v947
        %v949 = vpop.f32.mrb[0].mxu0
        %v950 = vadd.f32 0.0, %v949
        %v951 = vpop.f32.mrb[0].mxu0
        %v952 = vadd.f32 0.0, %v951
        %v953 = vpop.f32.mrb[0].mxu0
        %v954 = vadd.f32 0.0, %v953
        %955 = vmatprep.mubr.bf16.mxu0 0
        %956 = vmatmul.mubr.bf16.gmra.mrb[0].mxu0 %v893
        %v957 = vpop.f32.mrb[0].mxu0
        %v958 = vadd.f32 0.0, %v957
        %v959 = vpop.f32.mrb[0].mxu0
        %v960 = vadd.f32 0.0, %v959
        %v961 = vpop.f32.mrb[0].mxu0
        %v962 = vadd.f32 0.0, %v961
        %v963 = vpop.f32.mrb[0].mxu0
        %v964 = vadd.f32 0.0, %v963
        %965 = vmatprep.mubr.bf16.mxu0 0
        %966 = vmatmul.mubr.bf16.gmra.mrb[0].mxu0 %v896
        %v967 = vpop.f32.mrb[0].mxu0
        %v968 = vadd.f32 0.0, %v967
        %v969 = vpop.f32.mrb[0].mxu0
        %v970 = vadd.f32 0.0, %v969
        %v971 = vpop.f32.mrb[0].mxu0
        %v972 = vadd.f32 0.0, %v971
        %v973 = vpop.f32.mrb[0].mxu0
        %v974 = vadd.f32 0.0, %v973
        %975 = vmatprep.mubr.bf16.mxu0 0
        %976 = vmatmul.mubr.bf16.gmra.mrb[0].mxu0 %v899
        %v977 = vpop.f32.mrb[0].mxu0
        %v978 = vadd.f32 0.0, %v977
        %v979 = vpop.f32.mrb[0].mxu0
        %v980 = vadd.f32 0.0, %v979
        %v981 = vpop.f32.mrb[0].mxu0
        %v982 = vadd.f32 0.0, %v981
        %v983 = vpop.f32.mrb[0].mxu0
        %v984 = vadd.f32 0.0, %v983
        %985 = vmatprep.mubr.bf16.mxu0 0
        %986 = vmatmul.mubr.bf16.gmra.mrb[0].mxu0 %v902
        %v987 = vpop.f32.mrb[0].mxu0
        %v988 = vadd.f32 0.0, %v987
        %v989 = vpop.f32.mrb[0].mxu0
        %v990 = vadd.f32 0.0, %v989
        %v991 = vpop.f32.mrb[0].mxu0
        %v992 = vadd.f32 0.0, %v991
        %v993 = vpop.f32.mrb[0].mxu0
        %v994 = vadd.f32 0.0, %v993
        %995 = vmatprep.mubr.bf16.mxu0 0
        %996 = vmatmul.mubr.bf16.gmra.mrb[0].mxu0 %v905
        %v997 = vpop.f32.mrb[0].mxu0
        %v998 = vadd.f32 0.0, %v997
        %v999 = vpop.f32.mrb[0].mxu0
        %v1000 = vadd.f32 0.0, %v999
        %v1001 = vpop.f32.mrb[0].mxu0
        %v1002 = vadd.f32 0.0, %v1001
        %v1003 = vpop.f32.mrb[0].mxu0
        %v1004 = vadd.f32 0.0, %v1003
        %1005 = vmatprep.mubr.bf16.mxu0 0
        %1006 = vmatmul.mubr.bf16.gmra.mrb[0].mxu0 %v908
        %v1007 = vpop.f32.mrb[0].mxu0
        %v1008 = vadd.f32 0.0, %v1007
        %v1009 = vpop.f32.mrb[0].mxu0
        %v1010 = vadd.f32 0.0, %v1009
        %v1011 = vpop.f32.mrb[0].mxu0
        %v1012 = vadd.f32 0.0, %v1011
        %v1013 = vpop.f32.mrb[0].mxu0
        %v1014 = vadd.f32 0.0, %v1013
        %1015 = vmatprep.mubr.bf16.mxu0 0
        %1016 = vmatmul.mubr.bf16.gmra.mrb[0].mxu0 %v911
        %v1017 = vpop.f32.mrb[0].mxu0
        %v1018 = vadd.f32 0.0, %v1017
        %v1019 = vpop.f32.mrb[0].mxu0
        %v1020 = vadd.f32 0.0, %v1019
        %v1021 = vpop.f32.mrb[0].mxu0
        %v1022 = vadd.f32 0.0, %v1021
        %v1023 = vpop.f32.mrb[0].mxu0
        %v1024 = vadd.f32 0.0, %v1023
        %1025 = vdwg.mxu0
        %1026 = vmatprep.subr.bf16.mxu0 %v883
        %1027 = vmatpush1.bf16.msra.mxu0 %v882
        %1028 = vmatprep.subr.bf16.mxu0 0
        %1029 = vmatpush1.bf16.msra.mxu0 0
        %1030 = vmatprep.subr.bf16.mxu0 0
        %1031 = vmatpush1.bf16.msra.mxu0 0
        %1032 = vmatprep.subr.bf16.mxu0 0
        %1033 = vmatpush1.bf16.msra.mxu0 0
        %1034 = vmatprep.subr.bf16.mxu0 0
        %1035 = vmatpush1.bf16.msra.mxu0 0
        %1036 = vmatprep.subr.bf16.mxu0 0
        %1037 = vmatpush1.bf16.msra.mxu0 0
        %1038 = vmatprep.subr.bf16.mxu0 0
        %1039 = vmatpush1.bf16.msra.mxu0 0
        %1040 = vmatprep.subr.bf16.mxu0 0
        %1041 = vmatpush1.bf16.msra.mxu0 0
        %1042 = vmatprep.subr.bf16.mxu0 0
        %1043 = vmatpush1.bf16.msra.mxu0 0
        %1044 = vmatprep.subr.bf16.mxu0 0
        %1045 = vmatpush1.bf16.msra.mxu0 0
        %1046 = vmatprep.subr.bf16.mxu0 0
        %1047 = vmatpush1.bf16.msra.mxu0 0
        %1048 = vmatprep.subr.bf16.mxu0 0
        %1049 = vmatpush1.bf16.msra.mxu0 0
        %1050 = vmatprep.subr.bf16.mxu0 0
        %1051 = vmatpush1.bf16.msra.mxu0 0
        %1052 = vmatprep.subr.bf16.mxu0 0
        %1053 = vmatpush1.bf16.msra.mxu0 0
        %1054 = vmatprep.subr.bf16.mxu0 0
        %1055 = vmatpush1.bf16.msra.mxu0 0
        %1056 = vmatprep.subr.bf16.mxu0 0
        %1057 = vmatpush1.bf16.msra.mxu0 0
        %1058 = vmatprep.mubr.bf16.mxu0 0
        %1059 = vmatmul.mubr.bf16.gmra.mrb[0].mxu0 %v890
        %v1060 = vpop.f32.mrb[0].mxu0
        %v1061 = vadd.f32 0.0, %v1060
        %v1062 = vpop.f32.mrb[0].mxu0
        %v1063 = vadd.f32 0.0, %v1062
        %v1064 = vpop.f32.mrb[0].mxu0
        %v1065 = vadd.f32 0.0, %v1064
        %v1066 = vpop.f32.mrb[0].mxu0
        %v1067 = vadd.f32 0.0, %v1066
        %1068 = vmatprep.mubr.bf16.mxu0 0
        %1069 = vmatmul.mubr.bf16.gmra.mrb[0].mxu0 %v893
        %v1070 = vpop.f32.mrb[0].mxu0
        %v1071 = vadd.f32 0.0, %v1070
        %v1072 = vpop.f32.mrb[0].mxu0
        %v1073 = vadd.f32 0.0, %v1072
        %v1074 = vpop.f32.mrb[0].mxu0
        %v1075 = vadd.f32 0.0, %v1074
        %v1076 = vpop.f32.mrb[0].mxu0
        %v1077 = vadd.f32 0.0, %v1076
        %1078 = vmatprep.mubr.bf16.mxu0 0
        %1079 = vmatmul.mubr.bf16.gmra.mrb[0].mxu0 %v896
        %v1080 = vpop.f32.mrb[0].mxu0
        %v1081 = vadd.f32 0.0, %v1080
        %v1082 = vpop.f32.mrb[0].mxu0
        %v1083 = vadd.f32 0.0, %v1082
        %v1084 = vpop.f32.mrb[0].mxu0
        %v1085 = vadd.f32 0.0, %v1084
        %v1086 = vpop.f32.mrb[0].mxu0
        %v1087 = vadd.f32 0.0, %v1086
        %1088 = vmatprep.mubr.bf16.mxu0 0
        %1089 = vmatmul.mubr.bf16.gmra.mrb[0].mxu0 %v899
        %v1090 = vpop.f32.mrb[0].mxu0
        %v1091 = vadd.f32 0.0, %v1090
        %v1092 = vpop.f32.mrb[0].mxu0
        %v1093 = vadd.f32 0.0, %v1092
        %v1094 = vpop.f32.mrb[0].mxu0
        %v1095 = vadd.f32 0.0, %v1094
        %v1096 = vpop.f32.mrb[0].mxu0
        %v1097 = vadd.f32 0.0, %v1096
        %1098 = vmatprep.mubr.bf16.mxu0 0
        %1099 = vmatmul.mubr.bf16.gmra.mrb[0].mxu0 %v902
        %v1100 = vpop.f32.mrb[0].mxu0
        %v1101 = vadd.f32 0.0, %v1100
        %v1102 = vpop.f32.mrb[0].mxu0
        %v1103 = vadd.f32 0.0, %v1102
        %v1104 = vpop.f32.mrb[0].mxu0
        %v1105 = vadd.f32 0.0, %v1104
        %v1106 = vpop.f32.mrb[0].mxu0
        %v1107 = vadd.f32 0.0, %v1106
        %1108 = vmatprep.mubr.bf16.mxu0 0
        %1109 = vmatmul.mubr.bf16.gmra.mrb[0].mxu0 %v905
        %v1110 = vpop.f32.mrb[0].mxu0
        %v1111 = vadd.f32 0.0, %v1110
        %v1112 = vpop.f32.mrb[0].mxu0
        %v1113 = vadd.f32 0.0, %v1112
        %v1114 = vpop.f32.mrb[0].mxu0
        %v1115 = vadd.f32 0.0, %v1114
        %v1116 = vpop.f32.mrb[0].mxu0
        %v1117 = vadd.f32 0.0, %v1116
        %1118 = vmatprep.mubr.bf16.mxu0 0
        %1119 = vmatmul.mubr.bf16.gmra.mrb[0].mxu0 %v908
        %v1120 = vpop.f32.mrb[0].mxu0
        %v1121 = vadd.f32 0.0, %v1120
        %v1122 = vpop.f32.mrb[0].mxu0
        %v1123 = vadd.f32 0.0, %v1122
        %v1124 = vpop.f32.mrb[0].mxu0
        %v1125 = vadd.f32 0.0, %v1124
        %v1126 = vpop.f32.mrb[0].mxu0
        %v1127 = vadd.f32 0.0, %v1126
        %1128 = vmatprep.mubr.bf16.mxu0 0
        %1129 = vmatmul.mubr.bf16.gmra.mrb[0].mxu0 %v911
        %v1130 = vpop.f32.mrb[0].mxu0
        %v1131 = vadd.f32 0.0, %v1130
        %v1132 = vpop.f32.mrb[0].mxu0
        %v1133 = vadd.f32 0.0, %v1132
        %v1134 = vpop.f32.mrb[0].mxu0
        %v1135 = vadd.f32 0.0, %v1134
        %v1136 = vpop.f32.mrb[0].mxu0
        %v1137 = vadd.f32 0.0, %v1136
        %1138 = vdwg.mxu0
        %v1139 = vpack.c.bf16 %v952, %v948
        %v1140 = vpack.c.bf16 %v954, %v950
        %v1141 = vpack.c.bf16 %v1065, %v1061
        %v1142 = vpack.c.bf16 %v1067, %v1063
        %v1143 = vpack.c.bf16 %v962, %v958
        %v1144 = vpack.c.bf16 %v964, %v960
        %v1145 = vpack.c.bf16 %v1075, %v1071
        %v1146 = vpack.c.bf16 %v1077, %v1073
        %v1147 = vpack.c.bf16 %v972, %v968
        %v1148 = vpack.c.bf16 %v974, %v970
        %v1149 = vpack.c.bf16 %v1085, %v1081
        %v1150 = vpack.c.bf16 %v1087, %v1083
        %v1151 = vpack.c.bf16 %v982, %v978
        %v1152 = vpack.c.bf16 %v984, %v980
        %v1153 = vpack.c.bf16 %v1095, %v1091
        %v1154 = vpack.c.bf16 %v1097, %v1093
        %v1155 = vpack.c.bf16 %v992, %v988
        %v1156 = vpack.c.bf16 %v994, %v990
        %v1157 = vpack.c.bf16 %v1105, %v1101
        %v1158 = vpack.c.bf16 %v1107, %v1103
        %v1159 = vpack.c.bf16 %v1002, %v998
        %v1160 = vpack.c.bf16 %v1004, %v1000
        %v1161 = vpack.c.bf16 %v1115, %v1111
        %v1162 = vpack.c.bf16 %v1117, %v1113
        %v1163 = vpack.c.bf16 %v1012, %v1008
        %v1164 = vpack.c.bf16 %v1014, %v1010
        %v1165 = vpack.c.bf16 %v1125, %v1121
        %v1166 = vpack.c.bf16 %v1127, %v1123
        %v1167 = vpack.c.bf16 %v1022, %v1018
        %v1168 = vpack.c.bf16 %v1024, %v1020
        %v1169 = vpack.c.bf16 %v1135, %v1131
        %v1170 = vpack.c.bf16 %v1137, %v1133
        %v1171 = vld [vmem:[%s351] sm:$0xf]
        %v1172 = vld [vmem:[%s351 + $0x4] sm:$0xf]
        %v1173 = vld [vmem:[%s351 + $0x8] sm:$0xf]
        %v1174 = vld [vmem:[%s351 + $0xc] sm:$0xf]
        %v1175 = vld [vmem:[%s351 + $0x10] sm:$0xf]
        %v1176 = vld [vmem:[%s351 + $0x14] sm:$0xf]
        %v1177 = vld [vmem:[%s351 + $0x18] sm:$0xf]
        %v1178 = vld [vmem:[%s351 + $0x1c] sm:$0xf]
        %v1179 = vld [vmem:[%s351 + $0x20] sm:$0xf]
        %v1180 = vld [vmem:[%s351 + $0x24] sm:$0xf]
        %v1181 = vld [vmem:[%s351 + $0x28] sm:$0xf]
        %v1182 = vld [vmem:[%s351 + $0x2c] sm:$0xf]
        %v1183 = vld [vmem:[%s351 + $0x30] sm:$0xf]
        %v1184 = vld [vmem:[%s351 + $0x34] sm:$0xf]
        %v1185 = vld [vmem:[%s351 + $0x38] sm:$0xf]
        %v1186 = vld [vmem:[%s351 + $0x3c] sm:$0xf]
        %v1187 = vld [vmem:[%s351 + $0x40] sm:$0xf]
        %v1188 = vld [vmem:[%s351 + $0x44] sm:$0xf]
        %v1189 = vld [vmem:[%s351 + $0x48] sm:$0xf]
        %v1190 = vld [vmem:[%s351 + $0x4c] sm:$0xf]
        %v1191 = vld [vmem:[%s351 + $0x50] sm:$0xf]
        %v1192 = vld [vmem:[%s351 + $0x54] sm:$0xf]
        %v1193 = vld [vmem:[%s351 + $0x58] sm:$0xf]
        %v1194 = vld [vmem:[%s351 + $0x5c] sm:$0xf]
        %v1195 = vld [vmem:[%s351 + $0x60] sm:$0xf]
        %v1196 = vld [vmem:[%s351 + $0x64] sm:$0xf]
        %v1197 = vld [vmem:[%s351 + $0x68] sm:$0xf]
        %v1198 = vld [vmem:[%s351 + $0x6c] sm:$0xf]
        %v1199 = vld [vmem:[%s351 + $0x70] sm:$0xf]
        %v1200 = vld [vmem:[%s351 + $0x74] sm:$0xf]
        %v1201 = vld [vmem:[%s351 + $0x78] sm:$0xf]
        %v1202 = vld [vmem:[%s351 + $0x7c] sm:$0xf]
        %v1211 = vunpack.c.l.b16 %v1179
        %v1212 = vunpack.c.l.b16 %v1180
        %v1213 = vunpack.c.l.b16 %v1181
        %v1214 = vunpack.c.l.b16 %v1182
        %v1215 = vunpack.c.l.b16 %v1183
        %v1216 = vunpack.c.l.b16 %v1184
        %v1217 = vunpack.c.l.b16 %v1185
        %v1218 = vunpack.c.l.b16 %v1186
        %v1219 = vpack.c.b16 %v1212, %v1211
        %v1220 = vpack.c.b16 %v1214, %v1213
        %v1221 = vpack.c.b16 %v1216, %v1215
        %v1222 = vpack.c.b16 %v1218, %v1217
        %1227 = vmatprep.subr.bf16.mxu0 0
        %1228 = vmatpush1.bf16.msra.mxu0 %v1140
        %1229 = vmatprep.subr.bf16.mxu0 0
        %1230 = vmatpush1.bf16.msra.mxu0 %v1144
        %1231 = vmatprep.subr.bf16.mxu0 0
        %1232 = vmatpush1.bf16.msra.mxu0 %v1148
        %1233 = vmatprep.subr.bf16.mxu0 0
        %1234 = vmatpush1.bf16.msra.mxu0 %v1152
        %1235 = vmatprep.subr.bf16.mxu0 0
        %1236 = vmatpush1.bf16.msra.mxu0 %v1156
        %1237 = vmatprep.subr.bf16.mxu0 0
        %1238 = vmatpush1.bf16.msra.mxu0 %v1160
        %1239 = vmatprep.subr.bf16.mxu0 0
        %1240 = vmatpush1.bf16.msra.mxu0 %v1164
        %1241 = vmatprep.subr.bf16.mxu0 0
        %1242 = vmatpush1.bf16.msra.mxu0 %v1168
        %1243 = vmatprep.subr.bf16.mxu0 0
        %1244 = vmatpush1.bf16.msra.mxu0 0
        %1245 = vmatprep.subr.bf16.mxu0 0
        %1246 = vmatpush1.bf16.msra.mxu0 0
        %1247 = vmatprep.subr.bf16.mxu0 0
        %1248 = vmatpush1.bf16.msra.mxu0 0
        %1249 = vmatprep.subr.bf16.mxu0 0
        %1250 = vmatpush1.bf16.msra.mxu0 0
        %1251 = vmatprep.subr.bf16.mxu0 0
        %1252 = vmatpush1.bf16.msra.mxu0 0
        %1253 = vmatprep.subr.bf16.mxu0 0
        %1254 = vmatpush1.bf16.msra.mxu0 0
        %1255 = vmatprep.subr.bf16.mxu0 0
        %1256 = vmatpush1.bf16.msra.mxu0 0
        %1257 = vmatprep.subr.bf16.mxu0 0
        %1258 = vmatpush1.bf16.msra.mxu0 0
        %1259 = vmatprep.mubr.bf16.mxu0 0
        %1260 = vmatmul.mubr.bf16.gmra.mrb[0].mxu0 %v1219
        %v1261 = vpop.f32.mrb[0].mxu0
        %v1262 = vadd.f32 0.0, %v1261
        %v1263 = vpop.f32.mrb[0].mxu0
        %v1264 = vpop.f32.mrb[0].mxu0
        %v1265 = vadd.f32 0.0, %v1264
        %v1266 = vpop.f32.mrb[0].mxu0
        %1267 = vmatprep.mubr.bf16.mxu0 0
        %1268 = vmatmul.mubr.bf16.gmra.mrb[0].mxu0 %v1220
        %v1269 = vpop.f32.mrb[0].mxu0
        %v1270 = vadd.f32 0.0, %v1269
        %v1271 = vpop.f32.mrb[0].mxu0
        %v1272 = vpop.f32.mrb[0].mxu0
        %v1273 = vadd.f32 0.0, %v1272
        %v1274 = vpop.f32.mrb[0].mxu0
        %1275 = vmatprep.mubr.bf16.mxu0 0
        %1276 = vmatmul.mubr.bf16.gmra.mrb[0].mxu0 %v1221
        %v1277 = vpop.f32.mrb[0].mxu0
        %v1278 = vadd.f32 0.0, %v1277
        %v1279 = vpop.f32.mrb[0].mxu0
        %v1280 = vpop.f32.mrb[0].mxu0
        %v1281 = vadd.f32 0.0, %v1280
        %v1282 = vpop.f32.mrb[0].mxu0
        %1283 = vmatprep.mubr.bf16.mxu0 0
        %1284 = vmatmul.mubr.bf16.gmra.mrb[0].mxu0 %v1222
        %v1285 = vpop.f32.mrb[0].mxu0
        %v1286 = vadd.f32 0.0, %v1285
        %v1287 = vpop.f32.mrb[0].mxu0
        %v1288 = vpop.f32.mrb[0].mxu0
        %v1289 = vadd.f32 0.0, %v1288
        %v1290 = vpop.f32.mrb[0].mxu0
        %1291 = vdwg.mxu0
        %v1300 = vunpack.c.l.b16 %v1171
        %v1301 = vunpack.c.l.b16 %v1172
        %v1302 = vunpack.c.l.b16 %v1173
        %v1303 = vunpack.c.l.b16 %v1174
        %v1304 = vunpack.c.l.b16 %v1175
        %v1305 = vunpack.c.l.b16 %v1176
        %v1306 = vunpack.c.l.b16 %v1177
        %v1307 = vunpack.c.l.b16 %v1178
        %v1308 = vpack.c.b16 %v1301, %v1300
        %v1309 = vpack.c.b16 %v1303, %v1302
        %v1310 = vpack.c.b16 %v1305, %v1304
        %v1311 = vpack.c.b16 %v1307, %v1306
        %1316 = vmatprep.subr.bf16.mxu0 0
        %1317 = vmatpush1.bf16.msra.mxu0 %v1139
        %1318 = vmatprep.subr.bf16.mxu0 0
        %1319 = vmatpush1.bf16.msra.mxu0 %v1143
        %1320 = vmatprep.subr.bf16.mxu0 0
        %1321 = vmatpush1.bf16.msra.mxu0 %v1147
        %1322 = vmatprep.subr.bf16.mxu0 0
        %1323 = vmatpush1.bf16.msra.mxu0 %v1151
        %1324 = vmatprep.subr.bf16.mxu0 0
        %1325 = vmatpush1.bf16.msra.mxu0 %v1155
        %1326 = vmatprep.subr.bf16.mxu0 0
        %1327 = vmatpush1.bf16.msra.mxu0 %v1159
        %1328 = vmatprep.subr.bf16.mxu0 0
        %1329 = vmatpush1.bf16.msra.mxu0 %v1163
        %1330 = vmatprep.subr.bf16.mxu0 0
        %1331 = vmatpush1.bf16.msra.mxu0 %v1167
        %1332 = vmatprep.subr.bf16.mxu0 0
        %1333 = vmatpush1.bf16.msra.mxu0 0
        %1334 = vmatprep.subr.bf16.mxu0 0
        %1335 = vmatpush1.bf16.msra.mxu0 0
        %1336 = vmatprep.subr.bf16.mxu0 0
        %1337 = vmatpush1.bf16.msra.mxu0 0
        %1338 = vmatprep.subr.bf16.mxu0 0
        %1339 = vmatpush1.bf16.msra.mxu0 0
        %1340 = vmatprep.subr.bf16.mxu0 0
        %1341 = vmatpush1.bf16.msra.mxu0 0
        %1342 = vmatprep.subr.bf16.mxu0 0
        %1343 = vmatpush1.bf16.msra.mxu0 0
        %1344 = vmatprep.subr.bf16.mxu0 0
        %1345 = vmatpush1.bf16.msra.mxu0 0
        %1346 = vmatprep.subr.bf16.mxu0 0
        %1347 = vmatpush1.bf16.msra.mxu0 0
        %1348 = vmatprep.mubr.bf16.mxu0 0
        %1349 = vmatmul.mubr.bf16.gmra.mrb[0].mxu0 %v1308
        %v1350 = vpop.f32.mrb[0].mxu0
        %v1351 = vadd.f32 %v1262, %v1350
        %v1352 = vpop.f32.mrb[0].mxu0
        %v1353 = vpop.f32.mrb[0].mxu0
        %v1354 = vadd.f32 %v1265, %v1353
        %v1355 = vpop.f32.mrb[0].mxu0
        %1356 = vmatprep.mubr.bf16.mxu0 0
        %1357 = vmatmul.mubr.bf16.gmra.mrb[0].mxu0 %v1309
        %v1358 = vpop.f32.mrb[0].mxu0
        %v1359 = vadd.f32 %v1270, %v1358
        %v1360 = vpop.f32.mrb[0].mxu0
        %v1361 = vpop.f32.mrb[0].mxu0
        %v1362 = vadd.f32 %v1273, %v1361
        %v1363 = vpop.f32.mrb[0].mxu0
        %1364 = vmatprep.mubr.bf16.mxu0 0
        %1365 = vmatmul.mubr.bf16.gmra.mrb[0].mxu0 %v1310
        %v1366 = vpop.f32.mrb[0].mxu0
        %v1367 = vadd.f32 %v1278, %v1366
        %v1368 = vpop.f32.mrb[0].mxu0
        %v1369 = vpop.f32.mrb[0].mxu0
        %v1370 = vadd.f32 %v1281, %v1369
        %v1371 = vpop.f32.mrb[0].mxu0
        %1372 = vmatprep.mubr.bf16.mxu0 0
        %1373 = vmatmul.mubr.bf16.gmra.mrb[0].mxu0 %v1311
        %v1374 = vpop.f32.mrb[0].mxu0
        %v1375 = vadd.f32 %v1286, %v1374
        %v1376 = vpop.f32.mrb[0].mxu0
        %v1377 = vpop.f32.mrb[0].mxu0
        %v1378 = vadd.f32 %v1289, %v1377
        %v1379 = vpop.f32.mrb[0].mxu0
        %1380 = vdwg.mxu0
        %v1389 = vunpack.c.l.b16 %v1187
        %v1390 = vunpack.c.l.b16 %v1188
        %v1391 = vunpack.c.l.b16 %v1189
        %v1392 = vunpack.c.l.b16 %v1190
        %v1393 = vunpack.c.l.b16 %v1191
        %v1394 = vunpack.c.l.b16 %v1192
        %v1395 = vunpack.c.l.b16 %v1193
        %v1396 = vunpack.c.l.b16 %v1194
        %v1397 = vpack.c.b16 %v1390, %v1389
        %v1398 = vpack.c.b16 %v1392, %v1391
        %v1399 = vpack.c.b16 %v1394, %v1393
        %v1400 = vpack.c.b16 %v1396, %v1395
        %1405 = vmatprep.subr.bf16.mxu0 0
        %1406 = vmatpush1.bf16.msra.mxu0 %v1141
        %1407 = vmatprep.subr.bf16.mxu0 0
        %1408 = vmatpush1.bf16.msra.mxu0 %v1145
        %1409 = vmatprep.subr.bf16.mxu0 0
        %1410 = vmatpush1.bf16.msra.mxu0 %v1149
        %1411 = vmatprep.subr.bf16.mxu0 0
        %1412 = vmatpush1.bf16.msra.mxu0 %v1153
        %1413 = vmatprep.subr.bf16.mxu0 0
        %1414 = vmatpush1.bf16.msra.mxu0 %v1157
        %1415 = vmatprep.subr.bf16.mxu0 0
        %1416 = vmatpush1.bf16.msra.mxu0 %v1161
        %1417 = vmatprep.subr.bf16.mxu0 0
        %1418 = vmatpush1.bf16.msra.mxu0 %v1165
        %1419 = vmatprep.subr.bf16.mxu0 0
        %1420 = vmatpush1.bf16.msra.mxu0 %v1169
        %1421 = vmatprep.subr.bf16.mxu0 0
        %1422 = vmatpush1.bf16.msra.mxu0 0
        %1423 = vmatprep.subr.bf16.mxu0 0
        %1424 = vmatpush1.bf16.msra.mxu0 0
        %1425 = vmatprep.subr.bf16.mxu0 0
        %1426 = vmatpush1.bf16.msra.mxu0 0
        %1427 = vmatprep.subr.bf16.mxu0 0
        %1428 = vmatpush1.bf16.msra.mxu0 0
        %1429 = vmatprep.subr.bf16.mxu0 0
        %1430 = vmatpush1.bf16.msra.mxu0 0
        %1431 = vmatprep.subr.bf16.mxu0 0
        %1432 = vmatpush1.bf16.msra.mxu0 0
        %1433 = vmatprep.subr.bf16.mxu0 0
        %1434 = vmatpush1.bf16.msra.mxu0 0
        %1435 = vmatprep.subr.bf16.mxu0 0
        %1436 = vmatpush1.bf16.msra.mxu0 0
        %1437 = vmatprep.mubr.bf16.mxu0 0
        %1438 = vmatmul.mubr.bf16.gmra.mrb[0].mxu0 %v1397
        %v1439 = vpop.f32.mrb[0].mxu0
        %v1440 = vadd.f32 0.0, %v1439
        %v1441 = vpop.f32.mrb[0].mxu0
        %v1442 = vpop.f32.mrb[0].mxu0
        %v1443 = vadd.f32 0.0, %v1442
        %v1444 = vpop.f32.mrb[0].mxu0
        %1445 = vmatprep.mubr.bf16.mxu0 0
        %1446 = vmatmul.mubr.bf16.gmra.mrb[0].mxu0 %v1398
        %v1447 = vpop.f32.mrb[0].mxu0
        %v1448 = vadd.f32 0.0, %v1447
        %v1449 = vpop.f32.mrb[0].mxu0
        %v1450 = vpop.f32.mrb[0].mxu0
        %v1451 = vadd.f32 0.0, %v1450
        %v1452 = vpop.f32.mrb[0].mxu0
        %1453 = vmatprep.mubr.bf16.mxu0 0
        %1454 = vmatmul.mubr.bf16.gmra.mrb[0].mxu0 %v1399
        %v1455 = vpop.f32.mrb[0].mxu0
        %v1456 = vadd.f32 0.0, %v1455
        %v1457 = vpop.f32.mrb[0].mxu0
        %v1458 = vpop.f32.mrb[0].mxu0
        %v1459 = vadd.f32 0.0, %v1458
        %v1460 = vpop.f32.mrb[0].mxu0
        %1461 = vmatprep.mubr.bf16.mxu0 0
        %1462 = vmatmul.mubr.bf16.gmra.mrb[0].mxu0 %v1400
        %v1463 = vpop.f32.mrb[0].mxu0
        %v1464 = vadd.f32 0.0, %v1463
        %v1465 = vpop.f32.mrb[0].mxu0
        %v1466 = vpop.f32.mrb[0].mxu0
        %v1467 = vadd.f32 0.0, %v1466
        %v1468 = vpop.f32.mrb[0].mxu0
        %1469 = vdwg.mxu0
        %v1470 = vadd.f32 %v1351, %v1440
        %v1471 = vadd.f32 %v1354, %v1443
        %v1472 = vadd.f32 %v1359, %v1448
        %v1473 = vadd.f32 %v1362, %v1451
        %v1474 = vadd.f32 %v1367, %v1456
        %v1475 = vadd.f32 %v1370, %v1459
        %v1476 = vadd.f32 %v1375, %v1464
        %v1477 = vadd.f32 %v1378, %v1467
        %v1486 = vunpack.c.l.b16 %v1195
        %v1487 = vunpack.c.l.b16 %v1196
        %v1488 = vunpack.c.l.b16 %v1197
        %v1489 = vunpack.c.l.b16 %v1198
        %v1490 = vunpack.c.l.b16 %v1199
        %v1491 = vunpack.c.l.b16 %v1200
        %v1492 = vunpack.c.l.b16 %v1201
        %v1493 = vunpack.c.l.b16 %v1202
        %v1494 = vpack.c.b16 %v1487, %v1486
        %v1495 = vpack.c.b16 %v1489, %v1488
        %v1496 = vpack.c.b16 %v1491, %v1490
        %v1497 = vpack.c.b16 %v1493, %v1492
        %1502 = vmatprep.subr.bf16.mxu0 0
        %1503 = vmatpush1.bf16.msra.mxu0 %v1142
        %1504 = vmatprep.subr.bf16.mxu0 0
        %1505 = vmatpush1.bf16.msra.mxu0 %v1146
        %1506 = vmatprep.subr.bf16.mxu0 0
        %1507 = vmatpush1.bf16.msra.mxu0 %v1150
        %1508 = vmatprep.subr.bf16.mxu0 0
        %1509 = vmatpush1.bf16.msra.mxu0 %v1154
        %1510 = vmatprep.subr.bf16.mxu0 0
        %1511 = vmatpush1.bf16.msra.mxu0 %v1158
        %1512 = vmatprep.subr.bf16.mxu0 0
        %1513 = vmatpush1.bf16.msra.mxu0 %v1162
        %1514 = vmatprep.subr.bf16.mxu0 0
        %1515 = vmatpush1.bf16.msra.mxu0 %v1166
        %1516 = vmatprep.subr.bf16.mxu0 0
        %1517 = vmatpush1.bf16.msra.mxu0 %v1170
        %1518 = vmatprep.subr.bf16.mxu0 0
        %1519 = vmatpush1.bf16.msra.mxu0 0
        %1520 = vmatprep.subr.bf16.mxu0 0
        %1521 = vmatpush1.bf16.msra.mxu0 0
        %1522 = vmatprep.subr.bf16.mxu0 0
        %1523 = vmatpush1.bf16.msra.mxu0 0
        %1524 = vmatprep.subr.bf16.mxu0 0
        %1525 = vmatpush1.bf16.msra.mxu0 0
        %1526 = vmatprep.subr.bf16.mxu0 0
        %1527 = vmatpush1.bf16.msra.mxu0 0
        %1528 = vmatprep.subr.bf16.mxu0 0
        %1529 = vmatpush1.bf16.msra.mxu0 0
        %1530 = vmatprep.subr.bf16.mxu0 0
        %1531 = vmatpush1.bf16.msra.mxu0 0
        %1532 = vmatprep.subr.bf16.mxu0 0
        %1533 = vmatpush1.bf16.msra.mxu0 0
        %1534 = vmatprep.mubr.bf16.mxu0 0
        %1535 = vmatmul.mubr.bf16.gmra.mrb[0].mxu0 %v1494
        %v1536 = vpop.f32.mrb[0].mxu0
        %v1537 = vadd.f32 0.0, %v1536
        %v1538 = vpop.f32.mrb[0].mxu0
        %v1539 = vpop.f32.mrb[0].mxu0
        %v1540 = vadd.f32 0.0, %v1539
        %v1541 = vpop.f32.mrb[0].mxu0
        %1542 = vmatprep.mubr.bf16.mxu0 0
        %1543 = vmatmul.mubr.bf16.gmra.mrb[0].mxu0 %v1495
        %v1544 = vpop.f32.mrb[0].mxu0
        %v1545 = vadd.f32 0.0, %v1544
        %v1546 = vpop.f32.mrb[0].mxu0
        %v1547 = vpop.f32.mrb[0].mxu0
        %v1548 = vadd.f32 0.0, %v1547
        %v1549 = vpop.f32.mrb[0].mxu0
        %1550 = vmatprep.mubr.bf16.mxu0 0
        %1551 = vmatmul.mubr.bf16.gmra.mrb[0].mxu0 %v1496
        %v1552 = vpop.f32.mrb[0].mxu0
        %v1553 = vadd.f32 0.0, %v1552
        %v1554 = vpop.f32.mrb[0].mxu0
        %v1555 = vpop.f32.mrb[0].mxu0
        %v1556 = vadd.f32 0.0, %v1555
        %v1557 = vpop.f32.mrb[0].mxu0
        %1558 = vmatprep.mubr.bf16.mxu0 0
        %1559 = vmatmul.mubr.bf16.gmra.mrb[0].mxu0 %v1497
        %v1560 = vpop.f32.mrb[0].mxu0
        %v1561 = vadd.f32 0.0, %v1560
        %v1562 = vpop.f32.mrb[0].mxu0
        %v1563 = vpop.f32.mrb[0].mxu0
        %v1564 = vadd.f32 0.0, %v1563
        %v1565 = vpop.f32.mrb[0].mxu0
        %1566 = vdwg.mxu0
        %v1567 = vadd.f32 %v1470, %v1537
        %v1568 = vadd.f32 %v1471, %v1540
        %v1569 = vadd.f32 %v1472, %v1545
        %v1570 = vadd.f32 %v1473, %v1548
        %v1571 = vadd.f32 %v1474, %v1553
        %v1572 = vadd.f32 %v1475, %v1556
        %v1573 = vadd.f32 %v1476, %v1561
        %v1574 = vadd.f32 %v1477, %v1564
        %v1575 = vld [vmem:[#allocation2] sm:$0xff]
        %v1576 = vld [vmem:[#allocation2 + $0x8] sm:$0xff]
        %v1577 = vld [vmem:[#allocation2 + $0x10] sm:$0xff]
        %v1578 = vld [vmem:[#allocation2 + $0x18] sm:$0xff]
        %v1579 = vld [vmem:[#allocation2 + $0x20] sm:$0xff]
        %v1580 = vld [vmem:[#allocation2 + $0x28] sm:$0xff]
        %v1581 = vld [vmem:[#allocation2 + $0x30] sm:$0xff]
        %v1582 = vld [vmem:[#allocation2 + $0x38] sm:$0xff]
        %v1583 = vadd.f32 %v1575, %v1567
        %v1584 = vadd.f32 %v1576, %v1568
        %v1585 = vadd.f32 %v1577, %v1569
        %v1586 = vadd.f32 %v1578, %v1570
        %v1587 = vadd.f32 %v1579, %v1571
        %v1588 = vadd.f32 %v1580, %v1572
        %v1589 = vadd.f32 %v1581, %v1573
        %v1590 = vadd.f32 %v1582, %v1574
        %1591 = vst [vmem:[#allocation2] sm:$0xff] %v1583
        %1592 = vst [vmem:[#allocation2 + $0x8] sm:$0xff] %v1584
        %1593 = vst [vmem:[#allocation2 + $0x10] sm:$0xff] %v1585
        %1594 = vst [vmem:[#allocation2 + $0x18] sm:$0xff] %v1586
        %1595 = vst [vmem:[#allocation2 + $0x20] sm:$0xff] %v1587
        %1596 = vst [vmem:[#allocation2 + $0x28] sm:$0xff] %v1588
        %1597 = vst [vmem:[#allocation2 + $0x30] sm:$0xff] %v1589
        %1598 = vst [vmem:[#allocation2 + $0x38] sm:$0xff] %v1590
        %p1599 = scmp.eq.s32.totalorder %s29, 1
        // Predicated region
        $region57: #{tpu_custom_call.1} parent=47 // pred_check
          %p1600 = pneg %p1599
        $region58: #{tpu_custom_call.1} parent=47 // pred_check_branch
          %1602 = sbr.rel (%p1600) target = $region60
        $region59: #{tpu_custom_call.1} parent=47 // pred_region
          %v1603 = vld [vmem:[#allocation2] sm:$0xff]
          %v1604 = vld [vmem:[#allocation2 + $0x8] sm:$0xff]
          %v1605 = vld [vmem:[#allocation2 + $0x10] sm:$0xff]
          %v1606 = vld [vmem:[#allocation2 + $0x18] sm:$0xff]
          %v1607 = vld [vmem:[#allocation2 + $0x20] sm:$0xff]
          %v1608 = vld [vmem:[#allocation2 + $0x28] sm:$0xff]
          %v1609 = vld [vmem:[#allocation2 + $0x30] sm:$0xff]
          %v1610 = vld [vmem:[#allocation2 + $0x38] sm:$0xff]
          %v1611 = vmax.f32 %v1603, 0.0
          %v1612 = vmax.f32 %v1604, 0.0
          %v1613 = vmax.f32 %v1605, 0.0
          %v1614 = vmax.f32 %v1606, 0.0
          %v1615 = vmax.f32 %v1607, 0.0
          %v1616 = vmax.f32 %v1608, 0.0
          %v1617 = vmax.f32 %v1609, 0.0
          %v1618 = vmax.f32 %v1610, 0.0
          %1619 = vst [vmem:[%s401] sm:$0xff] %v1611
          %1620 = vst [vmem:[%s401 + $0x8] sm:$0xff] %v1612
          %1621 = vst [vmem:[%s401 + $0x10] sm:$0xff] %v1613
          %1622 = vst [vmem:[%s401 + $0x18] sm:$0xff] %v1614
          %1623 = vst [vmem:[%s401 + $0x20] sm:$0xff] %v1615
          %1624 = vst [vmem:[%s401 + $0x28] sm:$0xff] %v1616
          %1625 = vst [vmem:[%s401 + $0x30] sm:$0xff] %v1617
          %1626 = vst [vmem:[%s401 + $0x38] sm:$0xff] %v1618
        $region60: #{tpu_custom_call.1} parent=47 // pred_fallthru
          _
        %s1627 = sand.u32 %s218, 1
        %s1628 = scalar_lea.sflag [#allocation5], %s1627
        %s1629 = sand.u32 %s218, 1
        %s1630 = smul.addr %s1629, 64
        %s1631 = scalar_lea.vmem [#allocation6], %s1630
        // Predicated region
        $region61: #{tpu_custom_call.1} parent=47 // pred_check
          %p1632 = pneg %p228
        $region62: #{tpu_custom_call.1} parent=47 // pred_check_branch
          %1634 = sbr.rel (%p1632) target = $region64
        $region63: #{tpu_custom_call.1} parent=47 // pred_region
          %s1635 = smul.u32 8, %s28
          %s1637 = ssub.s32 1024, 1024
          %1638 = vsyncadd %s1628, %s1637
          %s1639 = smul.addr %s1635, 128
          %s1640 = scalar_lea.hbm %s7, %s1639
          %s1641 = sshll.u32 %s1631, 4
          %s1642 = int_to_ptr.vmem [resolvable:$true] %s1641
          %1647 = dma.vmem_to_hbm [thread:$0]  %s1642, 1024, %s1640, %s1628, 128, 128, 8
        $region64: #{tpu_custom_call.1} parent=47 // pred_fallthru
          _
      $region48: #{tpu_custom_call.1} parent=5 // pred_fallthru
        _
      %p1648 = scmp.le.s32.totalorder 2, %s19
      // Predicated region
      $region65: #{tpu_custom_call.1} parent=5 // pred_check
        %p1649 = pneg %p1648
      $region66: #{tpu_custom_call.1} parent=5 // pred_check_branch
        %1651 = sbr.rel (%p1649) target = $region68
      $region67: #{tpu_custom_call.1} parent=5 // pred_region
        %s1652 = ssub.s32 %s19, 2
        // Predicated region
        $region69: #{tpu_custom_call.1} parent=67 // pred_check
          %p1653 = pneg %p234
        $region70: #{tpu_custom_call.1} parent=67 // pred_check_branch
          %1655 = sbr.rel (%p1653) target = $region72
        $region71: #{tpu_custom_call.1} parent=67 // pred_region
          %s1656 = sand.u32 %s219, 1
          %s1657 = scalar_lea.sflag [#allocation5], %s1656
          %s1658 = sand.u32 %s219, 1
          %s1659 = smul.addr %s1658, 64
          %s1660 = scalar_lea.vmem [#allocation6], %s1659
          %1661 = dma.done %s1657, 1024
        $region72: #{tpu_custom_call.1} parent=67 // pred_fallthru
          _
      $region68: #{tpu_custom_call.1} parent=5 // pred_fallthru
        _
    $region6: #{tpu_custom_call.1} parent=1 // loop_footer
      %s23 = sadd.s32 1, %s19
    $region7: #{tpu_custom_call.1} parent=1 // loop_footer_branch
      %18 = sbr.rel target = $region3
    $region8: #{tpu_custom_call.1} parent=1 // loop_exit
      _
    %1662 = vsyncpa [#allocation4], 1
    %s1663 = scalar_lea.sflag [#allocation4], 1
    %1664 = vsyncpa %s1663, 1
    %1665 = vsyncpa [#allocation5], 1
    %s1666 = scalar_lea.sflag [#allocation5], 1
    %1667 = vsyncpa %s1666, 1

</llo_original>
